<compile_context>
chip_gen: v5e
topology: v5e:2x2
jax: 0.10.0
libtpu: 0.0.40
codegen_flags: <defaults>
</compile_context>

<pallas_src>
import math

import jax
import jax.numpy as jnp
from jax.experimental import pallas as pl
from jax.experimental.pallas import tpu as pltpu


def _layer_norm(y, gamma, beta, eps=1e-5):
    mu = jnp.mean(y, axis=-1, keepdims=True)
    var = jnp.mean((y - mu) ** 2, axis=-1, keepdims=True)
    return (y - mu) * jax.lax.rsqrt(var + eps) * gamma + beta


def _make_kernel(num_heads, seq_len, d_model, d_ff, batch_tile, ff_chunk, exp_dtype):
    dh = d_model // num_heads
    Bt, S, D = batch_tile, seq_len, d_model
    M = Bt * S
    n_ff_chunks = d_ff // ff_chunk

    def kernel(x_ref,
               wq_ref, wk_ref, wv_ref, bq_ref, bk_ref, bv_ref,
               wo_ref, bo_ref,
               g1_ref, be1_ref,
               w1_ref, b1_ref, w2_ref, b2_ref,
               g2_ref, be2_ref,
               o_ref,
               attn_scratch):
        # Fold the batch tile into the matmul M dimension: (Bt, S, D) -> (Bt*S, D).
        # S % 8 == 0 (asserted in the wrapper) keeps this reshape layout-preserving.
        x = x_ref[...].reshape(M, D).astype(jnp.float32)       # residual path in f32
        x_bf = x.astype(jnp.bfloat16)

        # ---- QKV projections (bf16 MXU inputs, f32 accumulation) -----------
        # 1/sqrt(dh) is pre-folded into wq/bq by the wrapper (no per-step VPU mul).
        q = jnp.dot(x_bf, wq_ref[...], preferred_element_type=jnp.float32) + bq_ref[...]
        k = jnp.dot(x_bf, wk_ref[...], preferred_element_type=jnp.float32) + bk_ref[...]
        v = jnp.dot(x_bf, wv_ref[...], preferred_element_type=jnp.float32) + bv_ref[...]

        q3 = q.reshape(Bt, S, D).astype(jnp.bfloat16)
        k3 = k.reshape(Bt, S, D).astype(jnp.bfloat16)
        v3 = v.reshape(Bt, S, D).astype(jnp.bfloat16)

        # ---- Multi-head self-attention, batched over the Bt batch rows -----
        for h in range(num_heads):                      # small static unroll over heads
            sl = slice(h * dh, (h + 1) * dh)
            qh, kh, vh = q3[:, :, sl], k3[:, :, sl], v3[:, :, sl]   # (Bt, S, dh)
            # Transpose-free scores: contract the shared dh axis directly.
            s = jnp.einsum('bqd,bkd->bqk', qh, kh,
                           preferred_element_type=jnp.float32)      # (Bt, S, S) f32
            s = s - jnp.max(s, axis=-1, keepdims=True)
            p = jnp.exp(s.astype(exp_dtype))            # bf16 exp on v6e/v7x EUP
            denom = jnp.sum(p.astype(jnp.float32), axis=-1, keepdims=True)
            oh = jnp.einsum('bqk,bkd->bqd', p.astype(jnp.bfloat16), vh,
                            preferred_element_type=jnp.float32)     # (Bt, S, dh)
            # Normalize AFTER the PV matmul (S*dh elements instead of S*S) and
            # write straight into the per-head slice of the VMEM scratch
            # (no concatenate / relayout, bounded live range).
            attn_scratch[:, :, sl] = oh * pl.reciprocal(denom, approx=True)

        attn = attn_scratch[...].reshape(M, D)
        attn = jnp.dot(attn.astype(jnp.bfloat16), wo_ref[...],
                       preferred_element_type=jnp.float32) + bo_ref[...]

        # ---- Add & LayerNorm 1 (f32) ----------------------------------------
        h1 = _layer_norm(x + attn, g1_ref[...], be1_ref[...])
        h1_bf = h1.astype(jnp.bfloat16)

        # ---- Position-wise FFN, chunked over d_ff (caps (M, d_ff) live f32) --
        ff = jnp.zeros((M, D), jnp.float32)
        for c in range(n_ff_chunks):
            c0 = c * ff_chunk
            a = jnp.dot(h1_bf, w1_ref[:, c0:c0 + ff_chunk],
                        preferred_element_type=jnp.float32) + b1_ref[:, c0:c0 + ff_chunk]
            a = jnp.maximum(a, 0.0).astype(jnp.bfloat16)            # ReLU
            ff = ff + jnp.dot(a, w2_ref[c0:c0 + ff_chunk, :],
                              preferred_element_type=jnp.float32)
        ff = ff + b2_ref[...]

        # ---- Add & LayerNorm 2 (f32) ----------------------------------------
        out = _layer_norm(h1 + ff, g2_ref[...], be2_ref[...])
        o_ref[...] = out.reshape(Bt, S, D).astype(o_ref.dtype)

    return kernel


def _pick_ff_chunk(d_ff, max_chunk=1024):
    """Largest divisor of d_ff that is <= max_chunk (caps the FFN intermediate)."""
    best = 1
    for c in range(1, min(d_ff, max_chunk) + 1):
        if d_ff % c == 0:
            best = c
    return best


def _weight_bytes(D, d_ff):
    # bf16 weight matrices (single-buffered) + f32 biases / LN params.
    return 2 * (4 * D * D + 2 * D * d_ff) + 4 * (8 * D + 2 * d_ff)


def _act_bytes(bt, S, D, ff_chunk):
    M = bt * S
    # ~10 f32 (M, D) activations, 2 (M, ff_chunk) FFN temporaries,
    # 2 (S, S) f32 score/exp buffers, double-buffered x in/out tiles.
    return (4 * M * (10 * D + 2 * ff_chunk)
            + 2 * 4 * bt * S * S
            + 2 * 2 * 4 * M * D)


def _pick_batch_tile(B, S, D, d_ff, ff_chunk, target_rows=512, vmem_budget=48 << 20):
    """Largest batch tile (dividing B) whose working set fits a v7x-safe VMEM
    budget and whose Bt*S reaches ~target_rows of MXU M; keeps >= 2 grid steps
    when B > 1 so both v7x TensorCores get work."""
    wbytes = _weight_bytes(D, d_ff)
    best = 1
    for bt in range(1, B + 1):
        if B % bt:
            continue
        if bt > 1 and wbytes + _act_bytes(bt, S, D, ff_chunk) > vmem_budget:
            break
        best = bt
        if bt * S >= target_rows:
            break
    if B > 1 and B // best < 2:
        best = max(d for d in range(1, B) if B % d == 0)
    return best


def _vmem_limit_bytes(bt, S, D, d_ff, ff_chunk):
    need = int(1.4 * (_weight_bytes(D, d_ff) + _act_bytes(bt, S, D, ff_chunk)))
    return max(32 << 20, min(need, 64 << 20))      # 64 MiB cap keeps v7x happy


def encoder_block_pallas(x_bsd, params, num_heads, batch_tile=None, exp_in_bf16=True):
    """Batch-first entry point: x_bsd is (B, S, D) float32. No HBM transposes.

    Set exp_in_bf16=False on v5e (no bf16 EUP); True is the v6e/v7x fast path.
    For best MXU/lane utilization D and d_ff should be multiples of 128
    (256 on v6e/v7x); other sizes still run but use masked partial stores.
    """
    B, S, D = x_bsd.shape
    d_ff = params["w1"].shape[1]
    dh = D // num_heads
    assert D % num_heads == 0, "d_model must be divisible by num_heads"
    assert S % 8 == 0, "seq_len must be a multiple of 8 (sublane tile)"

    ff_chunk = _pick_ff_chunk(d_ff)
    if batch_tile is None:
        batch_tile = _pick_batch_tile(B, S, D, d_ff, ff_chunk)
    assert B % batch_tile == 0
    grid = (B // batch_tile,)

    exp_dtype = jnp.bfloat16 if exp_in_bf16 else jnp.float32
    kernel = _make_kernel(num_heads, S, D, d_ff, batch_tile, ff_chunk, exp_dtype)

    bf16 = jnp.bfloat16
    scale = 1.0 / math.sqrt(dh)
    # Fold the softmax scale into the Q projection (one-time host/XLA op).
    wq = (params["wq_t"] * scale).astype(bf16)
    bq = params["bq"] * scale
    wk = params["wk_t"].astype(bf16)
    wv = params["wv_t"].astype(bf16)
    wo = params["wo_t"].astype(bf16)
    w1 = params["w1"].astype(bf16)
    w2 = params["w2"].astype(bf16)

    # Grid-invariant inputs: constant index_map => single-buffer them
    # (double-buffering buys zero overlap and doubles weight VMEM).
    def full(shape):
        return pl.BlockSpec(shape, lambda b: (0,) * len(shape),
                            pipeline_mode=pl.Buffered(1))

    in_specs = [
        pl.BlockSpec((batch_tile, S, D), lambda b: (b, 0, 0)),     # x (double-buffered)
        full((D, D)), full((D, D)), full((D, D)),                  # Wq^T*scale, Wk^T, Wv^T
        full((1, D)), full((1, D)), full((1, D)),                  # bq*scale, bk, bv
        full((D, D)), full((1, D)),                                # Wo^T, bo
        full((1, D)), full((1, D)),                                # norm1 gamma, beta
        full((D, d_ff)), full((1, d_ff)),                          # W1^T, b1
        full((d_ff, D)), full((1, D)),                             # W2^T, b2
        full((1, D)), full((1, D)),                                # norm2 gamma, beta
    ]

    flops = 8 * B * S * D * D + 4 * B * S * S * D + 4 * B * S * D * d_ff
    transcendentals = B * num_heads * S * S
    bytes_accessed = (8 * B * S * D                        # x in + out (f32)
                      + 2 * (4 * D * D + 2 * D * d_ff)     # bf16 weights
                      + 4 * (8 * D + 2 * d_ff))            # biases / LN params (f32)

    out = pl.pallas_call(
        kernel,
        out_shape=jax.ShapeDtypeStruct((B, S, D), x_bsd.dtype),
        grid_spec=pltpu.PrefetchScalarGridSpec(
            num_scalar_prefetch=0,
            grid=grid,
            in_specs=in_specs,
            out_specs=pl.BlockSpec((batch_tile, S, D), lambda b: (b, 0, 0)),
            scratch_shapes=[pltpu.VMEM((batch_tile, S, D), jnp.float32)],
        ),
        compiler_params=pltpu.CompilerParams(
            dimension_semantics=("parallel",),
            vmem_limit_bytes=_vmem_limit_bytes(batch_tile, S, D, d_ff, ff_chunk)),
        cost_estimate=pl.CostEstimate(
            flops=flops,
            transcendentals=transcendentals,
            bytes_accessed=bytes_accessed),
    )(
        x_bsd,
        wq, wk, wv,
        bq, params["bk"], params["bv"],
        wo, params["bo"],
        params["g1"], params["be1"],
        w1, params["b1"], w2, params["b2"],
        params["g2"], params["be2"],
    )
    return out


def encoder_block_pallas_seq_first(x_sbd, params, num_heads, **kw):
    """PyTorch-compatible entry: x is (S, B, D) like nn.MultiheadAttention's default.

    TODO(synk): callers that already hold (B, S, D) activations should call
    encoder_block_pallas directly and skip these two memory-bound HBM transposes.
    """
    x = jnp.transpose(x_sbd, (1, 0, 2))
    out = encoder_block_pallas(x, params, num_heads, **kw)
    return jnp.transpose(out, (1, 0, 2))


def encoder_block_ref(x_sbd, params, num_heads):
    """Pure-JAX f32 reference with identical math (for validation)."""
    S, B, D = x_sbd.shape
    dh = D // num_heads
    scale = 1.0 / math.sqrt(dh)
    x = jnp.transpose(x_sbd, (1, 0, 2))                       # (B, S, D)

    q = x @ params["wq_t"] + params["bq"]
    k = x @ params["wk_t"] + params["bk"]
    v = x @ params["wv_t"] + params["bv"]

    def split(t):  # (B, S, D) -> (B, H, S, dh)
        return t.reshape(B, S, num_heads, dh).transpose(0, 2, 1, 3)

    qh, kh, vh = split(q) * scale, split(k), split(v)
    s = jnp.einsum("bhsd,bhtd->bhst", qh, kh)
    p = jax.nn.softmax(s, axis=-1)
    attn = jnp.einsum("bhst,bhtd->bhsd", p, vh)
    attn = attn.transpose(0, 2, 1, 3).reshape(B, S, D)
    attn = attn @ params["wo_t"] + params["bo"]

    h1 = _layer_norm(x + attn, params["g1"], params["be1"])
    ff = jnp.maximum(h1 @ params["w1"] + params["b1"], 0.0) @ params["w2"] + params["b2"]
    out = _layer_norm(h1 + ff, params["g2"], params["be2"])
    return jnp.transpose(out, (1, 0, 2))


def init_params(key, d_model, d_ff):
    ks = jax.random.split(key, 8)
    sd = 0.02
    # PyTorch: in_proj_weight (3D, D) with q = x @ Wq.T ; store transposed weights.
    in_proj_w = jax.random.normal(ks[0], (3 * d_model, d_model), jnp.float32) * sd
    in_proj_b = jax.random.normal(ks[1], (3 * d_model,), jnp.float32) * sd
    out_proj_w = jax.random.normal(ks[2], (d_model, d_model), jnp.float32) * sd
    out_proj_b = jax.random.normal(ks[3], (d_model,), jnp.float32) * sd
    w1 = jax.random.normal(ks[4], (d_ff, d_model), jnp.float32) * sd
    b1 = jax.random.normal(ks[5], (d_ff,), jnp.float32) * sd
    w2 = jax.random.normal(ks[6], (d_model, d_ff), jnp.float32) * sd
    b2 = jax.random.normal(ks[7], (d_model,), jnp.float32) * sd
    row = lambda v: v.reshape(1, -1)
    return {
        "wq_t": in_proj_w[:d_model].T,
        "wk_t": in_proj_w[d_model:2 * d_model].T,
        "wv_t": in_proj_w[2 * d_model:].T,
        "bq": row(in_proj_b[:d_model]),
        "bk": row(in_proj_b[d_model:2 * d_model]),
        "bv": row(in_proj_b[2 * d_model:]),
        "wo_t": out_proj_w.T,
        "bo": row(out_proj_b),
        "g1": row(jnp.ones((d_model,), jnp.float32)),
        "be1": row(jnp.zeros((d_model,), jnp.float32)),
        "w1": w1.T,
        "b1": row(b1),
        "w2": w2.T,
        "b2": row(b2),
        "g2": row(jnp.ones((d_model,), jnp.float32)),
        "be2": row(jnp.zeros((d_model,), jnp.float32)),
    }


if __name__ == "__main__":
    # seq, batch, d_model, num_heads, d_ff  (D multiple of 128 -> lane-dense stores)
    S, B, D, H, F = 8, 2, 128, 4, 256

    key = jax.random.PRNGKey(0)
    k_x, k_p = jax.random.split(key)
    x = jax.random.normal(k_x, (S, B, D), jnp.float32)        # (seq, batch, d_model)
    params = init_params(k_p, D, F)

    out = encoder_block_pallas_seq_first(x, params, H)
    out = jax.block_until_ready(out)

    ref = encoder_block_ref(x, params, H)
    assert out.shape == (S, B, D)
    max_err = float(jnp.max(jnp.abs(out - ref)))
    # bf16 matmuls, bf16 exp + approx reciprocal vs f32 reference -> loosened tolerance.
    assert jnp.allclose(out, ref, rtol=3e-2, atol=3e-2), \
        f"mismatch vs reference (max abs err {max_err})"
    print("KERNEL_OK")
</pallas_src>

<mosaic_0001>
module attributes {stable_mosaic.version = 11 : i64} {
  func.func @kernel(%arg0: i32, %arg1: memref<1x8x128xf32, #tpu.memory_space<vmem>>, %arg2: memref<128x128xbf16, #tpu.memory_space<vmem>>, %arg3: memref<128x128xbf16, #tpu.memory_space<vmem>>, %arg4: memref<128x128xbf16, #tpu.memory_space<vmem>>, %arg5: memref<1x128xf32, #tpu.memory_space<vmem>>, %arg6: memref<1x128xf32, #tpu.memory_space<vmem>>, %arg7: memref<1x128xf32, #tpu.memory_space<vmem>>, %arg8: memref<128x128xbf16, #tpu.memory_space<vmem>>, %arg9: memref<1x128xf32, #tpu.memory_space<vmem>>, %arg10: memref<1x128xf32, #tpu.memory_space<vmem>>, %arg11: memref<1x128xf32, #tpu.memory_space<vmem>>, %arg12: memref<128x256xbf16, #tpu.memory_space<vmem>>, %arg13: memref<1x256xf32, #tpu.memory_space<vmem>>, %arg14: memref<256x128xbf16, #tpu.memory_space<vmem>>, %arg15: memref<1x128xf32, #tpu.memory_space<vmem>>, %arg16: memref<1x128xf32, #tpu.memory_space<vmem>>, %arg17: memref<1x128xf32, #tpu.memory_space<vmem>>, %arg18: memref<1x8x128xf32, #tpu.memory_space<vmem>>, %arg19: memref<1x8x128xf32, #tpu.memory_space<vmem>>) attributes {dimension_semantics = [#tpu.dimension_semantics<parallel>], iteration_bounds = array<i64: 2>, scalar_prefetch = 0 : i64, scratch_operands = 1 : i64, tpu.core_type = #tpu.core_type<tc>, window_params = [{transform_indices = @transform_0, window_bounds = array<i64: 1, 8, 128>}, {pipeline_mode = #tpu.pipeline_mode<synchronous>, transform_indices = @transform_1, window_bounds = array<i64: 128, 128>}, {pipeline_mode = #tpu.pipeline_mode<synchronous>, transform_indices = @transform_2, window_bounds = array<i64: 128, 128>}, {pipeline_mode = #tpu.pipeline_mode<synchronous>, transform_indices = @transform_3, window_bounds = array<i64: 128, 128>}, {pipeline_mode = #tpu.pipeline_mode<synchronous>, transform_indices = @transform_4, window_bounds = array<i64: 1, 128>}, {pipeline_mode = #tpu.pipeline_mode<synchronous>, transform_indices = @transform_5, window_bounds = array<i64: 1, 128>}, {pipeline_mode = #tpu.pipeline_mode<synchronous>, transform_indices = @transform_6, window_bounds = array<i64: 1, 128>}, {pipeline_mode = #tpu.pipeline_mode<synchronous>, transform_indices = @transform_7, window_bounds = array<i64: 128, 128>}, {pipeline_mode = #tpu.pipeline_mode<synchronous>, transform_indices = @transform_8, window_bounds = array<i64: 1, 128>}, {pipeline_mode = #tpu.pipeline_mode<synchronous>, transform_indices = @transform_9, window_bounds = array<i64: 1, 128>}, {pipeline_mode = #tpu.pipeline_mode<synchronous>, transform_indices = @transform_10, window_bounds = array<i64: 1, 128>}, {pipeline_mode = #tpu.pipeline_mode<synchronous>, transform_indices = @transform_11, window_bounds = array<i64: 128, 256>}, {pipeline_mode = #tpu.pipeline_mode<synchronous>, transform_indices = @transform_12, window_bounds = array<i64: 1, 256>}, {pipeline_mode = #tpu.pipeline_mode<synchronous>, transform_indices = @transform_13, window_bounds = array<i64: 256, 128>}, {pipeline_mode = #tpu.pipeline_mode<synchronous>, transform_indices = @transform_14, window_bounds = array<i64: 1, 128>}, {pipeline_mode = #tpu.pipeline_mode<synchronous>, transform_indices = @transform_15, window_bounds = array<i64: 1, 128>}, {pipeline_mode = #tpu.pipeline_mode<synchronous>, transform_indices = @transform_16, window_bounds = array<i64: 1, 128>}, {transform_indices = @transform_17, window_bounds = array<i64: 1, 8, 128>}]} {
    %c0 = arith.constant 0 : index
    %c0_0 = arith.constant 0 : index
    %c0_1 = arith.constant 0 : index
    %0 = vector.load %arg1[%c0, %c0_0, %c0_1] : memref<1x8x128xf32, #tpu.memory_space<vmem>>, vector<1x8x128xf32>
    %1 = vector.shape_cast %0 : vector<1x8x128xf32> to vector<8x128xf32>
    %2 = arith.truncf %1 : vector<8x128xf32> to vector<8x128xbf16>
    %c0_2 = arith.constant 0 : index
    %c0_3 = arith.constant 0 : index
    %3 = vector.load %arg2[%c0_2, %c0_3] : memref<128x128xbf16, #tpu.memory_space<vmem>>, vector<128x128xbf16>
    %cst = arith.constant dense<0.000000e+00> : vector<8x128xf32>
    %4 = tpu.matmul %2, %3, %cst {dimension_numbers = #tpu.dot_dimension_numbers<[1], [0], [0], [1], [0, 0, 1, 1], [], []>} : vector<8x128xbf16>, vector<128x128xbf16>, vector<8x128xf32> -> vector<8x128xf32>
    %c0_4 = arith.constant 0 : index
    %c0_5 = arith.constant 0 : index
    %5 = vector.load %arg5[%c0_4, %c0_5] : memref<1x128xf32, #tpu.memory_space<vmem>>, vector<1x128xf32>
    %6 = vector.broadcast %5 : vector<1x128xf32> to vector<8x128xf32>
    %7 = arith.addf %4, %6 : vector<8x128xf32>
    %c0_6 = arith.constant 0 : index
    %c0_7 = arith.constant 0 : index
    %8 = vector.load %arg3[%c0_6, %c0_7] : memref<128x128xbf16, #tpu.memory_space<vmem>>, vector<128x128xbf16>
    %cst_8 = arith.constant dense<0.000000e+00> : vector<8x128xf32>
    %9 = tpu.matmul %2, %8, %cst_8 {dimension_numbers = #tpu.dot_dimension_numbers<[1], [0], [0], [1], [0, 0, 1, 1], [], []>} : vector<8x128xbf16>, vector<128x128xbf16>, vector<8x128xf32> -> vector<8x128xf32>
    %c0_9 = arith.constant 0 : index
    %c0_10 = arith.constant 0 : index
    %10 = vector.load %arg6[%c0_9, %c0_10] : memref<1x128xf32, #tpu.memory_space<vmem>>, vector<1x128xf32>
    %11 = vector.broadcast %10 : vector<1x128xf32> to vector<8x128xf32>
    %12 = arith.addf %9, %11 : vector<8x128xf32>
    %c0_11 = arith.constant 0 : index
    %c0_12 = arith.constant 0 : index
    %13 = vector.load %arg4[%c0_11, %c0_12] : memref<128x128xbf16, #tpu.memory_space<vmem>>, vector<128x128xbf16>
    %cst_13 = arith.constant dense<0.000000e+00> : vector<8x128xf32>
    %14 = tpu.matmul %2, %13, %cst_13 {dimension_numbers = #tpu.dot_dimension_numbers<[1], [0], [0], [1], [0, 0, 1, 1], [], []>} : vector<8x128xbf16>, vector<128x128xbf16>, vector<8x128xf32> -> vector<8x128xf32>
    %c0_14 = arith.constant 0 : index
    %c0_15 = arith.constant 0 : index
    %15 = vector.load %arg7[%c0_14, %c0_15] : memref<1x128xf32, #tpu.memory_space<vmem>>, vector<1x128xf32>
    %16 = vector.broadcast %15 : vector<1x128xf32> to vector<8x128xf32>
    %17 = arith.addf %14, %16 : vector<8x128xf32>
    %18 = vector.shape_cast %7 : vector<8x128xf32> to vector<1x8x128xf32>
    %19 = arith.truncf %18 : vector<1x8x128xf32> to vector<1x8x128xbf16>
    %20 = vector.shape_cast %12 : vector<8x128xf32> to vector<1x8x128xf32>
    %21 = arith.truncf %20 : vector<1x8x128xf32> to vector<1x8x128xbf16>
    %22 = vector.shape_cast %17 : vector<8x128xf32> to vector<1x8x128xf32>
    %23 = arith.truncf %22 : vector<1x8x128xf32> to vector<1x8x128xbf16>
    %24 = vector.extract_strided_slice %19 {offsets = [0, 0, 0], sizes = [1, 8, 32], strides = [1, 1, 1]} : vector<1x8x128xbf16> to vector<1x8x32xbf16>
    %25 = vector.extract_strided_slice %21 {offsets = [0, 0, 0], sizes = [1, 8, 32], strides = [1, 1, 1]} : vector<1x8x128xbf16> to vector<1x8x32xbf16>
    %26 = vector.extract_strided_slice %23 {offsets = [0, 0, 0], sizes = [1, 8, 32], strides = [1, 1, 1]} : vector<1x8x128xbf16> to vector<1x8x32xbf16>
    "tpu.trace_start"() <{level = 10 : i32, message = "bqd,bkd->bqk"}> : () -> ()
    %cst_16 = arith.constant dense<0.000000e+00> : vector<1x8x8xf32>
    %27 = tpu.matmul %24, %25, %cst_16 {dimension_numbers = #tpu.dot_dimension_numbers<[2], [2], [1], [1], [0, 0, 0, 1, 1, 1], [0], [0]>} : vector<1x8x32xbf16>, vector<1x8x32xbf16>, vector<1x8x8xf32> -> vector<1x8x8xf32>
    "tpu.trace_stop"() : () -> ()
    %cst_17 = arith.constant dense<0xFF800000> : vector<1x8xf32>
    %28 = vector.multi_reduction <maximumf>, %27, %cst_17 [2] : vector<1x8x8xf32> to vector<1x8xf32>
    %29 = vector.shape_cast %28 : vector<1x8xf32> to vector<1x8x1xf32>
    %30 = vector.broadcast %29 : vector<1x8x1xf32> to vector<1x8x8xf32>
    %31 = arith.subf %27, %30 : vector<1x8x8xf32>
    %32 = arith.truncf %31 : vector<1x8x8xf32> to vector<1x8x8xbf16>
    %33 = math.exp %32 : vector<1x8x8xbf16>
    %34 = arith.extf %33 : vector<1x8x8xbf16> to vector<1x8x8xf32>
    %cst_18 = arith.constant dense<0.000000e+00> : vector<1x8xf32>
    %35 = vector.multi_reduction <add>, %34, %cst_18 [2] : vector<1x8x8xf32> to vector<1x8xf32>
    %36 = vector.shape_cast %35 : vector<1x8xf32> to vector<1x8x1xf32>
    "tpu.trace_start"() <{level = 10 : i32, message = "bqk,bkd->bqd"}> : () -> ()
    %cst_19 = arith.constant dense<0.000000e+00> : vector<1x8x32xf32>
    %37 = tpu.matmul %33, %26, %cst_19 {dimension_numbers = #tpu.dot_dimension_numbers<[2], [1], [1], [2], [0, 0, 0, 1, 1, 2], [0], [0]>} : vector<1x8x8xbf16>, vector<1x8x32xbf16>, vector<1x8x32xf32> -> vector<1x8x32xf32>
    "tpu.trace_stop"() : () -> ()
    %38 = tpu.reciprocal %36 {approx = true} : vector<1x8x1xf32> -> vector<1x8x1xf32>
    %39 = vector.broadcast %38 : vector<1x8x1xf32> to vector<1x8x32xf32>
    %40 = arith.mulf %37, %39 : vector<1x8x32xf32>
    %c0_20 = arith.constant 0 : index
    %c0_21 = arith.constant 0 : index
    %c0_22 = arith.constant 0 : index
    %41 = vector.load %arg19[%c0_20, %c0_21, %c0_22] : memref<1x8x128xf32, #tpu.memory_space<vmem>>, vector<1x8x32xf32>
    tpu.vector_store %arg19[%c0_20, %c0_21, %c0_22], %40 {strides = array<i32>} : memref<1x8x128xf32, #tpu.memory_space<vmem>>, vector<1x8x32xf32>,
    %42 = vector.extract_strided_slice %19 {offsets = [0, 0, 32], sizes = [1, 8, 32], strides = [1, 1, 1]} : vector<1x8x128xbf16> to vector<1x8x32xbf16>
    %43 = vector.extract_strided_slice %21 {offsets = [0, 0, 32], sizes = [1, 8, 32], strides = [1, 1, 1]} : vector<1x8x128xbf16> to vector<1x8x32xbf16>
    %44 = vector.extract_strided_slice %23 {offsets = [0, 0, 32], sizes = [1, 8, 32], strides = [1, 1, 1]} : vector<1x8x128xbf16> to vector<1x8x32xbf16>
    "tpu.trace_start"() <{level = 10 : i32, message = "bqd,bkd->bqk"}> : () -> ()
    %cst_23 = arith.constant dense<0.000000e+00> : vector<1x8x8xf32>
    %45 = tpu.matmul %42, %43, %cst_23 {dimension_numbers = #tpu.dot_dimension_numbers<[2], [2], [1], [1], [0, 0, 0, 1, 1, 1], [0], [0]>} : vector<1x8x32xbf16>, vector<1x8x32xbf16>, vector<1x8x8xf32> -> vector<1x8x8xf32>
    "tpu.trace_stop"() : () -> ()
    %cst_24 = arith.constant dense<0xFF800000> : vector<1x8xf32>
    %46 = vector.multi_reduction <maximumf>, %45, %cst_24 [2] : vector<1x8x8xf32> to vector<1x8xf32>
    %47 = vector.shape_cast %46 : vector<1x8xf32> to vector<1x8x1xf32>
    %48 = vector.broadcast %47 : vector<1x8x1xf32> to vector<1x8x8xf32>
    %49 = arith.subf %45, %48 : vector<1x8x8xf32>
    %50 = arith.truncf %49 : vector<1x8x8xf32> to vector<1x8x8xbf16>
    %51 = math.exp %50 : vector<1x8x8xbf16>
    %52 = arith.extf %51 : vector<1x8x8xbf16> to vector<1x8x8xf32>
    %cst_25 = arith.constant dense<0.000000e+00> : vector<1x8xf32>
    %53 = vector.multi_reduction <add>, %52, %cst_25 [2] : vector<1x8x8xf32> to vector<1x8xf32>
    %54 = vector.shape_cast %53 : vector<1x8xf32> to vector<1x8x1xf32>
    "tpu.trace_start"() <{level = 10 : i32, message = "bqk,bkd->bqd"}> : () -> ()
    %cst_26 = arith.constant dense<0.000000e+00> : vector<1x8x32xf32>
    %55 = tpu.matmul %51, %44, %cst_26 {dimension_numbers = #tpu.dot_dimension_numbers<[2], [1], [1], [2], [0, 0, 0, 1, 1, 2], [0], [0]>} : vector<1x8x8xbf16>, vector<1x8x32xbf16>, vector<1x8x32xf32> -> vector<1x8x32xf32>
    "tpu.trace_stop"() : () -> ()
    %56 = tpu.reciprocal %54 {approx = true} : vector<1x8x1xf32> -> vector<1x8x1xf32>
    %57 = vector.broadcast %56 : vector<1x8x1xf32> to vector<1x8x32xf32>
    %58 = arith.mulf %55, %57 : vector<1x8x32xf32>
    %c0_27 = arith.constant 0 : index
    %c0_28 = arith.constant 0 : index
    %c32 = arith.constant 32 : index
    %59 = vector.load %arg19[%c0_27, %c0_28, %c32] : memref<1x8x128xf32, #tpu.memory_space<vmem>>, vector<1x8x32xf32>
    tpu.vector_store %arg19[%c0_27, %c0_28, %c32], %58 {strides = array<i32>} : memref<1x8x128xf32, #tpu.memory_space<vmem>>, vector<1x8x32xf32>,
    %60 = vector.extract_strided_slice %19 {offsets = [0, 0, 64], sizes = [1, 8, 32], strides = [1, 1, 1]} : vector<1x8x128xbf16> to vector<1x8x32xbf16>
    %61 = vector.extract_strided_slice %21 {offsets = [0, 0, 64], sizes = [1, 8, 32], strides = [1, 1, 1]} : vector<1x8x128xbf16> to vector<1x8x32xbf16>
    %62 = vector.extract_strided_slice %23 {offsets = [0, 0, 64], sizes = [1, 8, 32], strides = [1, 1, 1]} : vector<1x8x128xbf16> to vector<1x8x32xbf16>
    "tpu.trace_start"() <{level = 10 : i32, message = "bqd,bkd->bqk"}> : () -> ()
    %cst_29 = arith.constant dense<0.000000e+00> : vector<1x8x8xf32>
    %63 = tpu.matmul %60, %61, %cst_29 {dimension_numbers = #tpu.dot_dimension_numbers<[2], [2], [1], [1], [0, 0, 0, 1, 1, 1], [0], [0]>} : vector<1x8x32xbf16>, vector<1x8x32xbf16>, vector<1x8x8xf32> -> vector<1x8x8xf32>
    "tpu.trace_stop"() : () -> ()
    %cst_30 = arith.constant dense<0xFF800000> : vector<1x8xf32>
    %64 = vector.multi_reduction <maximumf>, %63, %cst_30 [2] : vector<1x8x8xf32> to vector<1x8xf32>
    %65 = vector.shape_cast %64 : vector<1x8xf32> to vector<1x8x1xf32>
    %66 = vector.broadcast %65 : vector<1x8x1xf32> to vector<1x8x8xf32>
    %67 = arith.subf %63, %66 : vector<1x8x8xf32>
    %68 = arith.truncf %67 : vector<1x8x8xf32> to vector<1x8x8xbf16>
    %69 = math.exp %68 : vector<1x8x8xbf16>
    %70 = arith.extf %69 : vector<1x8x8xbf16> to vector<1x8x8xf32>
    %cst_31 = arith.constant dense<0.000000e+00> : vector<1x8xf32>
    %71 = vector.multi_reduction <add>, %70, %cst_31 [2] : vector<1x8x8xf32> to vector<1x8xf32>
    %72 = vector.shape_cast %71 : vector<1x8xf32> to vector<1x8x1xf32>
    "tpu.trace_start"() <{level = 10 : i32, message = "bqk,bkd->bqd"}> : () -> ()
    %cst_32 = arith.constant dense<0.000000e+00> : vector<1x8x32xf32>
    %73 = tpu.matmul %69, %62, %cst_32 {dimension_numbers = #tpu.dot_dimension_numbers<[2], [1], [1], [2], [0, 0, 0, 1, 1, 2], [0], [0]>} : vector<1x8x8xbf16>, vector<1x8x32xbf16>, vector<1x8x32xf32> -> vector<1x8x32xf32>
    "tpu.trace_stop"() : () -> ()
    %74 = tpu.reciprocal %72 {approx = true} : vector<1x8x1xf32> -> vector<1x8x1xf32>
    %75 = vector.broadcast %74 : vector<1x8x1xf32> to vector<1x8x32xf32>
    %76 = arith.mulf %73, %75 : vector<1x8x32xf32>
    %c0_33 = arith.constant 0 : index
    %c0_34 = arith.constant 0 : index
    %c64 = arith.constant 64 : index
    %77 = vector.load %arg19[%c0_33, %c0_34, %c64] : memref<1x8x128xf32, #tpu.memory_space<vmem>>, vector<1x8x32xf32>
    tpu.vector_store %arg19[%c0_33, %c0_34, %c64], %76 {strides = array<i32>} : memref<1x8x128xf32, #tpu.memory_space<vmem>>, vector<1x8x32xf32>,
    %78 = vector.extract_strided_slice %19 {offsets = [0, 0, 96], sizes = [1, 8, 32], strides = [1, 1, 1]} : vector<1x8x128xbf16> to vector<1x8x32xbf16>
    %79 = vector.extract_strided_slice %21 {offsets = [0, 0, 96], sizes = [1, 8, 32], strides = [1, 1, 1]} : vector<1x8x128xbf16> to vector<1x8x32xbf16>
    %80 = vector.extract_strided_slice %23 {offsets = [0, 0, 96], sizes = [1, 8, 32], strides = [1, 1, 1]} : vector<1x8x128xbf16> to vector<1x8x32xbf16>
    "tpu.trace_start"() <{level = 10 : i32, message = "bqd,bkd->bqk"}> : () -> ()
    %cst_35 = arith.constant dense<0.000000e+00> : vector<1x8x8xf32>
    %81 = tpu.matmul %78, %79, %cst_35 {dimension_numbers = #tpu.dot_dimension_numbers<[2], [2], [1], [1], [0, 0, 0, 1, 1, 1], [0], [0]>} : vector<1x8x32xbf16>, vector<1x8x32xbf16>, vector<1x8x8xf32> -> vector<1x8x8xf32>
    "tpu.trace_stop"() : () -> ()
    %cst_36 = arith.constant dense<0xFF800000> : vector<1x8xf32>
    %82 = vector.multi_reduction <maximumf>, %81, %cst_36 [2] : vector<1x8x8xf32> to vector<1x8xf32>
    %83 = vector.shape_cast %82 : vector<1x8xf32> to vector<1x8x1xf32>
    %84 = vector.broadcast %83 : vector<1x8x1xf32> to vector<1x8x8xf32>
    %85 = arith.subf %81, %84 : vector<1x8x8xf32>
    %86 = arith.truncf %85 : vector<1x8x8xf32> to vector<1x8x8xbf16>
    %87 = math.exp %86 : vector<1x8x8xbf16>
    %88 = arith.extf %87 : vector<1x8x8xbf16> to vector<1x8x8xf32>
    %cst_37 = arith.constant dense<0.000000e+00> : vector<1x8xf32>
    %89 = vector.multi_reduction <add>, %88, %cst_37 [2] : vector<1x8x8xf32> to vector<1x8xf32>
    %90 = vector.shape_cast %89 : vector<1x8xf32> to vector<1x8x1xf32>
    "tpu.trace_start"() <{level = 10 : i32, message = "bqk,bkd->bqd"}> : () -> ()
    %cst_38 = arith.constant dense<0.000000e+00> : vector<1x8x32xf32>
    %91 = tpu.matmul %87, %80, %cst_38 {dimension_numbers = #tpu.dot_dimension_numbers<[2], [1], [1], [2], [0, 0, 0, 1, 1, 2], [0], [0]>} : vector<1x8x8xbf16>, vector<1x8x32xbf16>, vector<1x8x32xf32> -> vector<1x8x32xf32>
    "tpu.trace_stop"() : () -> ()
    %92 = tpu.reciprocal %90 {approx = true} : vector<1x8x1xf32> -> vector<1x8x1xf32>
    %93 = vector.broadcast %92 : vector<1x8x1xf32> to vector<1x8x32xf32>
    %94 = arith.mulf %91, %93 : vector<1x8x32xf32>
    %c0_39 = arith.constant 0 : index
    %c0_40 = arith.constant 0 : index
    %c96 = arith.constant 96 : index
    %95 = vector.load %arg19[%c0_39, %c0_40, %c96] : memref<1x8x128xf32, #tpu.memory_space<vmem>>, vector<1x8x32xf32>
    tpu.vector_store %arg19[%c0_39, %c0_40, %c96], %94 {strides = array<i32>} : memref<1x8x128xf32, #tpu.memory_space<vmem>>, vector<1x8x32xf32>,
    %c0_41 = arith.constant 0 : index
    %c0_42 = arith.constant 0 : index
    %c0_43 = arith.constant 0 : index
    %96 = vector.load %arg19[%c0_41, %c0_42, %c0_43] : memref<1x8x128xf32, #tpu.memory_space<vmem>>, vector<1x8x128xf32>
    %97 = vector.shape_cast %96 : vector<1x8x128xf32> to vector<8x128xf32>
    %98 = arith.truncf %97 : vector<8x128xf32> to vector<8x128xbf16>
    %c0_44 = arith.constant 0 : index
    %c0_45 = arith.constant 0 : index
    %99 = vector.load %arg8[%c0_44, %c0_45] : memref<128x128xbf16, #tpu.memory_space<vmem>>, vector<128x128xbf16>
    %cst_46 = arith.constant dense<0.000000e+00> : vector<8x128xf32>
    %100 = tpu.matmul %98, %99, %cst_46 {dimension_numbers = #tpu.dot_dimension_numbers<[1], [0], [0], [1], [0, 0, 1, 1], [], []>} : vector<8x128xbf16>, vector<128x128xbf16>, vector<8x128xf32> -> vector<8x128xf32>
    %c0_47 = arith.constant 0 : index
    %c0_48 = arith.constant 0 : index
    %101 = vector.load %arg9[%c0_47, %c0_48] : memref<1x128xf32, #tpu.memory_space<vmem>>, vector<1x128xf32>
    %102 = vector.broadcast %101 : vector<1x128xf32> to vector<8x128xf32>
    %103 = arith.addf %100, %102 : vector<8x128xf32>
    %104 = arith.addf %1, %103 : vector<8x128xf32>
    %c0_49 = arith.constant 0 : index
    %c0_50 = arith.constant 0 : index
    %105 = vector.load %arg10[%c0_49, %c0_50] : memref<1x128xf32, #tpu.memory_space<vmem>>, vector<1x128xf32>
    %c0_51 = arith.constant 0 : index
    %c0_52 = arith.constant 0 : index
    %106 = vector.load %arg11[%c0_51, %c0_52] : memref<1x128xf32, #tpu.memory_space<vmem>>, vector<1x128xf32>
    %cst_53 = arith.constant dense<0.000000e+00> : vector<8xf32>
    %107 = vector.multi_reduction <add>, %104, %cst_53 [1] : vector<8x128xf32> to vector<8xf32>
    %108 = vector.shape_cast %107 : vector<8xf32> to vector<8x1xf32>
    %cst_54 = arith.constant 1.280000e+02 : f32
    %109 = vector.broadcast %cst_54 : f32 to vector<8x1xf32>
    %110 = arith.divf %108, %109 : vector<8x1xf32>
    %111 = vector.broadcast %110 : vector<8x1xf32> to vector<8x128xf32>
    %112 = arith.subf %104, %111 : vector<8x128xf32>
    %113 = arith.mulf %112, %112 : vector<8x128xf32>
    %cst_55 = arith.constant dense<0.000000e+00> : vector<8xf32>
    %114 = vector.multi_reduction <add>, %113, %cst_55 [1] : vector<8x128xf32> to vector<8xf32>
    %115 = vector.shape_cast %114 : vector<8xf32> to vector<8x1xf32>
    %cst_56 = arith.constant 1.280000e+02 : f32
    %116 = vector.broadcast %cst_56 : f32 to vector<8x1xf32>
    %117 = arith.divf %115, %116 : vector<8x1xf32>
    %118 = vector.broadcast %110 : vector<8x1xf32> to vector<8x128xf32>
    %119 = arith.subf %104, %118 : vector<8x128xf32>
    %cst_57 = arith.constant 9.99999974E-6 : f32
    %120 = vector.broadcast %cst_57 : f32 to vector<8x1xf32>
    %121 = arith.addf %117, %120 : vector<8x1xf32>
    %122 = math.rsqrt %121 : vector<8x1xf32>
    %123 = vector.broadcast %122 : vector<8x1xf32> to vector<8x128xf32>
    %124 = arith.mulf %119, %123 : vector<8x128xf32>
    %125 = vector.broadcast %105 : vector<1x128xf32> to vector<8x128xf32>
    %126 = arith.mulf %124, %125 : vector<8x128xf32>
    %127 = vector.broadcast %106 : vector<1x128xf32> to vector<8x128xf32>
    %128 = arith.addf %126, %127 : vector<8x128xf32>
    %129 = arith.truncf %128 : vector<8x128xf32> to vector<8x128xbf16>
    %cst_58 = arith.constant 0.000000e+00 : f32
    %130 = vector.broadcast %cst_58 : f32 to vector<8x128xf32>
    %c0_59 = arith.constant 0 : index
    %c0_60 = arith.constant 0 : index
    %131 = vector.load %arg12[%c0_59, %c0_60] : memref<128x256xbf16, #tpu.memory_space<vmem>>, vector<128x256xbf16>
    %cst_61 = arith.constant dense<0.000000e+00> : vector<8x256xf32>
    %132 = tpu.matmul %129, %131, %cst_61 {dimension_numbers = #tpu.dot_dimension_numbers<[1], [0], [0], [1], [0, 0, 1, 1], [], []>} : vector<8x128xbf16>, vector<128x256xbf16>, vector<8x256xf32> -> vector<8x256xf32>
    %c0_62 = arith.constant 0 : index
    %c0_63 = arith.constant 0 : index
    %133 = vector.load %arg13[%c0_62, %c0_63] : memref<1x256xf32, #tpu.memory_space<vmem>>, vector<1x256xf32>
    %134 = vector.broadcast %133 : vector<1x256xf32> to vector<8x256xf32>
    %135 = arith.addf %132, %134 : vector<8x256xf32>
    %cst_64 = arith.constant 0.000000e+00 : f32
    %136 = vector.broadcast %cst_64 : f32 to vector<8x256xf32>
    %137 = arith.maximumf %135, %136 : vector<8x256xf32>
    %138 = arith.truncf %137 : vector<8x256xf32> to vector<8x256xbf16>
    %c0_65 = arith.constant 0 : index
    %c0_66 = arith.constant 0 : index
    %139 = vector.load %arg14[%c0_65, %c0_66] : memref<256x128xbf16, #tpu.memory_space<vmem>>, vector<256x128xbf16>
    %cst_67 = arith.constant dense<0.000000e+00> : vector<8x128xf32>
    %140 = tpu.matmul %138, %139, %cst_67 {dimension_numbers = #tpu.dot_dimension_numbers<[1], [0], [0], [1], [0, 0, 1, 1], [], []>} : vector<8x256xbf16>, vector<256x128xbf16>, vector<8x128xf32> -> vector<8x128xf32>
    %141 = arith.addf %130, %140 : vector<8x128xf32>
    %c0_68 = arith.constant 0 : index
    %c0_69 = arith.constant 0 : index
    %142 = vector.load %arg15[%c0_68, %c0_69] : memref<1x128xf32, #tpu.memory_space<vmem>>, vector<1x128xf32>
    %143 = vector.broadcast %142 : vector<1x128xf32> to vector<8x128xf32>
    %144 = arith.addf %141, %143 : vector<8x128xf32>
    %145 = arith.addf %128, %144 : vector<8x128xf32>
    %c0_70 = arith.constant 0 : index
    %c0_71 = arith.constant 0 : index
    %146 = vector.load %arg16[%c0_70, %c0_71] : memref<1x128xf32, #tpu.memory_space<vmem>>, vector<1x128xf32>
    %c0_72 = arith.constant 0 : index
    %c0_73 = arith.constant 0 : index
    %147 = vector.load %arg17[%c0_72, %c0_73] : memref<1x128xf32, #tpu.memory_space<vmem>>, vector<1x128xf32>
    %cst_74 = arith.constant dense<0.000000e+00> : vector<8xf32>
    %148 = vector.multi_reduction <add>, %145, %cst_74 [1] : vector<8x128xf32> to vector<8xf32>
    %149 = vector.shape_cast %148 : vector<8xf32> to vector<8x1xf32>
    %cst_75 = arith.constant 1.280000e+02 : f32
    %150 = vector.broadcast %cst_75 : f32 to vector<8x1xf32>
    %151 = arith.divf %149, %150 : vector<8x1xf32>
    %152 = vector.broadcast %151 : vector<8x1xf32> to vector<8x128xf32>
    %153 = arith.subf %145, %152 : vector<8x128xf32>
    %154 = arith.mulf %153, %153 : vector<8x128xf32>
    %cst_76 = arith.constant dense<0.000000e+00> : vector<8xf32>
    %155 = vector.multi_reduction <add>, %154, %cst_76 [1] : vector<8x128xf32> to vector<8xf32>
    %156 = vector.shape_cast %155 : vector<8xf32> to vector<8x1xf32>
    %cst_77 = arith.constant 1.280000e+02 : f32
    %157 = vector.broadcast %cst_77 : f32 to vector<8x1xf32>
    %158 = arith.divf %156, %157 : vector<8x1xf32>
    %159 = vector.broadcast %151 : vector<8x1xf32> to vector<8x128xf32>
    %160 = arith.subf %145, %159 : vector<8x128xf32>
    %cst_78 = arith.constant 9.99999974E-6 : f32
    %161 = vector.broadcast %cst_78 : f32 to vector<8x1xf32>
    %162 = arith.addf %158, %161 : vector<8x1xf32>
    %163 = math.rsqrt %162 : vector<8x1xf32>
    %164 = vector.broadcast %163 : vector<8x1xf32> to vector<8x128xf32>
    %165 = arith.mulf %160, %164 : vector<8x128xf32>
    %166 = vector.broadcast %146 : vector<1x128xf32> to vector<8x128xf32>
    %167 = arith.mulf %165, %166 : vector<8x128xf32>
    %168 = vector.broadcast %147 : vector<1x128xf32> to vector<8x128xf32>
    %169 = arith.addf %167, %168 : vector<8x128xf32>
    %170 = vector.shape_cast %169 : vector<8x128xf32> to vector<1x8x128xf32>
    %c0_79 = arith.constant 0 : index
    %c0_80 = arith.constant 0 : index
    %c0_81 = arith.constant 0 : index
    %171 = vector.load %arg18[%c0_79, %c0_80, %c0_81] : memref<1x8x128xf32, #tpu.memory_space<vmem>>, vector<1x8x128xf32>
    tpu.vector_store %arg18[%c0_79, %c0_80, %c0_81], %170 {strides = array<i32>} : memref<1x8x128xf32, #tpu.memory_space<vmem>>, vector<1x8x128xf32>,
    return
  }
  func.func @transform_0(%arg0: i32) -> (i32, i32, i32) {
    %c0_i32 = arith.constant 0 : i32
    %c0_i32_0 = arith.constant 0 : i32
    %c0_i32_1 = arith.constant 0 : i32
    return %arg0, %c0_i32, %c0_i32_0 : i32, i32, i32
  }
  func.func @transform_1(%arg0: i32) -> (i32, i32) {
    %c0_i32 = arith.constant 0 : i32
    %c0_i32_0 = arith.constant 0 : i32
    %c0_i32_1 = arith.constant 0 : i32
    return %c0_i32, %c0_i32_0 : i32, i32
  }
  func.func @transform_2(%arg0: i32) -> (i32, i32) {
    %c0_i32 = arith.constant 0 : i32
    %c0_i32_0 = arith.constant 0 : i32
    %c0_i32_1 = arith.constant 0 : i32
    return %c0_i32, %c0_i32_0 : i32, i32
  }
  func.func @transform_3(%arg0: i32) -> (i32, i32) {
    %c0_i32 = arith.constant 0 : i32
    %c0_i32_0 = arith.constant 0 : i32
    %c0_i32_1 = arith.constant 0 : i32
    return %c0_i32, %c0_i32_0 : i32, i32
  }
  func.func @transform_4(%arg0: i32) -> (i32, i32) {
    %c0_i32 = arith.constant 0 : i32
    %c0_i32_0 = arith.constant 0 : i32
    %c0_i32_1 = arith.constant 0 : i32
    return %c0_i32, %c0_i32_0 : i32, i32
  }
  func.func @transform_5(%arg0: i32) -> (i32, i32) {
    %c0_i32 = arith.constant 0 : i32
    %c0_i32_0 = arith.constant 0 : i32
    %c0_i32_1 = arith.constant 0 : i32
    return %c0_i32, %c0_i32_0 : i32, i32
  }
  func.func @transform_6(%arg0: i32) -> (i32, i32) {
    %c0_i32 = arith.constant 0 : i32
    %c0_i32_0 = arith.constant 0 : i32
    %c0_i32_1 = arith.constant 0 : i32
    return %c0_i32, %c0_i32_0 : i32, i32
  }
  func.func @transform_7(%arg0: i32) -> (i32, i32) {
    %c0_i32 = arith.constant 0 : i32
    %c0_i32_0 = arith.constant 0 : i32
    %c0_i32_1 = arith.constant 0 : i32
    return %c0_i32, %c0_i32_0 : i32, i32
  }
  func.func @transform_8(%arg0: i32) -> (i32, i32) {
    %c0_i32 = arith.constant 0 : i32
    %c0_i32_0 = arith.constant 0 : i32
    %c0_i32_1 = arith.constant 0 : i32
    return %c0_i32, %c0_i32_0 : i32, i32
  }
  func.func @transform_9(%arg0: i32) -> (i32, i32) {
    %c0_i32 = arith.constant 0 : i32
    %c0_i32_0 = arith.constant 0 : i32
    %c0_i32_1 = arith.constant 0 : i32
    return %c0_i32, %c0_i32_0 : i32, i32
  }
  func.func @transform_10(%arg0: i32) -> (i32, i32) {
    %c0_i32 = arith.constant 0 : i32
    %c0_i32_0 = arith.constant 0 : i32
    %c0_i32_1 = arith.constant 0 : i32
    return %c0_i32, %c0_i32_0 : i32, i32
  }
  func.func @transform_11(%arg0: i32) -> (i32, i32) {
    %c0_i32 = arith.constant 0 : i32
    %c0_i32_0 = arith.constant 0 : i32
    %c0_i32_1 = arith.constant 0 : i32
    return %c0_i32, %c0_i32_0 : i32, i32
  }
  func.func @transform_12(%arg0: i32) -> (i32, i32) {
    %c0_i32 = arith.constant 0 : i32
    %c0_i32_0 = arith.constant 0 : i32
    %c0_i32_1 = arith.constant 0 : i32
    return %c0_i32, %c0_i32_0 : i32, i32
  }
  func.func @transform_13(%arg0: i32) -> (i32, i32) {
    %c0_i32 = arith.constant 0 : i32
    %c0_i32_0 = arith.constant 0 : i32
    %c0_i32_1 = arith.constant 0 : i32
    return %c0_i32, %c0_i32_0 : i32, i32
  }
  func.func @transform_14(%arg0: i32) -> (i32, i32) {
    %c0_i32 = arith.constant 0 : i32
    %c0_i32_0 = arith.constant 0 : i32
    %c0_i32_1 = arith.constant 0 : i32
    return %c0_i32, %c0_i32_0 : i32, i32
  }
  func.func @transform_15(%arg0: i32) -> (i32, i32) {
    %c0_i32 = arith.constant 0 : i32
    %c0_i32_0 = arith.constant 0 : i32
    %c0_i32_1 = arith.constant 0 : i32
    return %c0_i32, %c0_i32_0 : i32, i32
  }
  func.func @transform_16(%arg0: i32) -> (i32, i32) {
    %c0_i32 = arith.constant 0 : i32
    %c0_i32_0 = arith.constant 0 : i32
    %c0_i32_1 = arith.constant 0 : i32
    return %c0_i32, %c0_i32_0 : i32, i32
  }
  func.func @transform_17(%arg0: i32) -> (i32, i32, i32) {
    %c0_i32 = arith.constant 0 : i32
    %c0_i32_0 = arith.constant 0 : i32
    %c0_i32_1 = arith.constant 0 : i32
    return %arg0, %c0_i32, %c0_i32_0 : i32, i32, i32
  }
}

</mosaic_0001>

<llo_original>
// kernel: tpu_custom_call.1
$region0: #{tpu_custom_call.1}
  #allocation0 [shape = 'u32[]', space=smem, size = 0x4, offset = 0x4, fixed_abs, tag = 'smem constant byte address 0x4 - core index']
  #allocation1 [shape = 'u32[72,128]{1,0:T(1,128)}', space=vmem, size = 0x9000, scoped, tag = 'internal scratch']
  #allocation2 [shape = 'f32[1,8,128]{2,1,0:T(8,128)}', space=vmem, size = 0x1000, scoped, tag = 'scratch operand']
  %s0 = inlined_call_operand.hbm [shape: f32[2,8,128], index: 0, kind: input, shape index: {}]
  %s1 = inlined_call_operand.hbm [shape: bf16[128,128], index: 1, kind: input, shape index: {}]
  %s2 = inlined_call_operand.hbm [shape: bf16[128,128], index: 2, kind: input, shape index: {}]
  %s3 = inlined_call_operand.hbm [shape: bf16[128,128], index: 3, kind: input, shape index: {}]
  %s4 = inlined_call_operand.vmem [shape: f32[1,128], index: 4, kind: input, shape index: {}]
  %s5 = inlined_call_operand.vmem [shape: f32[1,128], index: 5, kind: input, shape index: {}]
  %s6 = inlined_call_operand.vmem [shape: f32[1,128], index: 6, kind: input, shape index: {}]
  %s7 = inlined_call_operand.hbm [shape: bf16[128,128], index: 7, kind: input, shape index: {}]
  %s8 = inlined_call_operand.vmem [shape: f32[1,128], index: 8, kind: input, shape index: {}]
  %s9 = inlined_call_operand.vmem [shape: f32[1,128], index: 9, kind: input, shape index: {}]
  %s10 = inlined_call_operand.vmem [shape: f32[1,128], index: 10, kind: input, shape index: {}]
  %s11 = inlined_call_operand.hbm [shape: bf16[128,256], index: 11, kind: input, shape index: {}]
  %s12 = inlined_call_operand.vmem [shape: f32[1,256], index: 12, kind: input, shape index: {}]
  %s13 = inlined_call_operand.hbm [shape: bf16[256,128], index: 13, kind: input, shape index: {}]
  %s14 = inlined_call_operand.vmem [shape: f32[1,128], index: 14, kind: input, shape index: {}]
  %s15 = inlined_call_operand.vmem [shape: f32[1,128], index: 15, kind: input, shape index: {}]
  %s16 = inlined_call_operand.vmem [shape: f32[1,128], index: 16, kind: input, shape index: {}]
  %s17 = inlined_call_operand.hbm [shape: f32[2,8,128], index: 17, kind: output, shape index: {}]
  %s18 = sld [smem:[#allocation0]]
  $region129: #{tpu_custom_call.1} parent=0
    _
  %s20 = ssub.s32 1, %s18
  %s21 = scalar_select 0, %s20, %s18
  $region1: #{tpu_custom_call.1} parent=0
    #allocation3 [shape = 'u8[8192]{0}', space=vmem, size = 0x2000, scoped, tag = 'input window, operand 0']
    #allocation4 [shape = 's32[2]{0}', space=sflag, size = 0x8, scoped, tag = 'scoped memory for tpu_custom_call.1']
    #allocation5 [shape = 's32[2]{0}', space=sflag, size = 0x8, scoped, tag = 'scoped memory for tpu_custom_call.1']
    #allocation6 [shape = 'u8[32768]{0}', space=vmem, size = 0x8000, scoped, tag = 'input window, operand 1, single buffered']
    #allocation7 [shape = 's32[1]{0}', space=sflag, size = 0x4, scoped, tag = 'scoped memory for tpu_custom_call.1']
    #allocation8 [shape = 'u8[32768]{0}', space=vmem, size = 0x8000, scoped, tag = 'input window, operand 2, single buffered']
    #allocation9 [shape = 'u8[32768]{0}', space=vmem, size = 0x8000, scoped, tag = 'input window, operand 3, single buffered']
    #allocation10 [shape = 's32[1]{0}', space=sflag, size = 0x4, scoped, tag = 'scoped memory for tpu_custom_call.1']
    #allocation11 [shape = 'u8[32768]{0}', space=vmem, size = 0x8000, scoped, tag = 'input window, operand 7, single buffered']
    #allocation12 [shape = 'u8[65536]{0}', space=vmem, size = 0x10000, scoped, tag = 'input window, operand 11, single buffered']
    #allocation13 [shape = 's32[1]{0}', space=sflag, size = 0x4, scoped, tag = 'scoped memory for tpu_custom_call.1']
    #allocation14 [shape = 'u8[65536]{0}', space=vmem, size = 0x10000, scoped, tag = 'input window, operand 13, single buffered']
    #allocation15 [shape = 'u8[8192]{0}', space=vmem, size = 0x2000, scoped, tag = 'output window, operand 0']
    %22 = vsyncpa [#allocation4], 0
    %s23 = scalar_lea.sflag [#allocation4], 1
    %24 = vsyncpa %s23, 0
    %25 = vsyncpa [#allocation7], 0
    %26 = vsyncpa [#allocation10], 0
    %27 = vsyncpa [#allocation13], 0
    %28 = vsyncpa [#allocation5], 0
    %s29 = scalar_lea.sflag [#allocation5], 1
    %30 = vsyncpa %s29, 0
    loop: start=0, step=1, limit=4
    $region2: #{tpu_custom_call.1} parent=1 // loop_pre_header
      _
    $region3: #{tpu_custom_call.1} parent=1 // loop_header
      %s32 = sphi 0, %s36
      %p33 = scmp.ge.s32.totalorder %s32, 4
      %s42 = sphi 0, %s44
      %s45 = sphi 0, %s42
      %s46 = sphi 0, %s45
      %s62 = sphi 0, %s46
      %s66 = sphi 0, %s66
      %s68 = sphi 0, %s66
      %s69 = sphi 0, %s68
      %s83 = sphi 0, %s69
      %s87 = sphi 0, %s87
      %s89 = sphi 0, %s87
      %s90 = sphi 0, %s89
      %s104 = sphi 0, %s90
      %s108 = sphi 0, %s108
      %s110 = sphi 0, %s108
      %s111 = sphi 0, %s110
      %s125 = sphi 0, %s111
      %s129 = sphi 0, %s129
      %s131 = sphi 0, %s129
      %s132 = sphi 0, %s131
      %s146 = sphi 0, %s132
      %s150 = sphi 0, %s150
      %s152 = sphi 0, %s150
      %s153 = sphi 0, %s152
      %s167 = sphi 0, %s153
      %s171 = sphi 0, %s171
      %s173 = sphi 0, %s171
      %s174 = sphi 0, %s173
      %s188 = sphi 0, %s174
      %s192 = sphi 0, %s192
      %s194 = sphi 0, %s192
      %s195 = sphi 0, %s194
      %s209 = sphi 0, %s195
      %s213 = sphi 0, %s213
      %s215 = sphi 0, %s213
      %s216 = sphi 0, %s215
      %s230 = sphi 0, %s216
      %s234 = sphi 0, %s234
      %s236 = sphi 0, %s234
      %s237 = sphi 0, %s236
      %s251 = sphi 0, %s237
      %s255 = sphi 0, %s255
      %s257 = sphi 0, %s255
      %s258 = sphi 0, %s257
      %s272 = sphi 0, %s258
      %s276 = sphi 0, %s276
      %s278 = sphi 0, %s276
      %s279 = sphi 0, %s278
      %s293 = sphi 0, %s279
      %s297 = sphi 0, %s297
      %s299 = sphi 0, %s297
      %s300 = sphi 0, %s299
      %s314 = sphi 0, %s300
      %s318 = sphi 0, %s318
      %s320 = sphi 0, %s318
      %s321 = sphi 0, %s320
      %s335 = sphi 0, %s321
      %s339 = sphi 0, %s339
      %s341 = sphi 0, %s339
      %s342 = sphi 0, %s341
      %s356 = sphi 0, %s342
      %s360 = sphi 0, %s360
      %s362 = sphi 0, %s360
      %s363 = sphi 0, %s362
      %s377 = sphi 0, %s363
      %s381 = sphi 0, %s381
      %s383 = sphi 0, %s381
      %s384 = sphi 0, %s383
      %s398 = sphi 0, %s384
      %s404 = sphi 0, %s406
      %s407 = sphi 0, %s404
      %s408 = sphi 0, %s407
      %s424 = sphi 0, %s408
    $region4: #{tpu_custom_call.1} parent=1 // loop_header_branch
      %35 = sbr.rel (%p33) target = $region8
    $region5: #{tpu_custom_call.1} parent=1 // loop_body
      %s37 = ssub.s32 %s32, 1
      %s38 = ssub.s32 %s32, 2
      %s39 = sadd.s32 %s32, 1
      %s40 = ssub.s32 %s32, %s39
      %p41 = scmp.eq.s32.totalorder %s40, 0
      %s43 = sadd.s32 %s42, 1
      %s44 = scalar_select %p41, %s42, %s43
      %p47 = pneg %p41
      %p48 = scmp.eq.s32.totalorder %s32, 1
      %p49 = por %p47, %p48
      %p50 = scmp.ne.s32.totalorder %s42, %s45
      %p51 = scmp.eq.s32.totalorder %s32, 0
      %p52 = por %p50, %p51
      %p53 = scmp.ne.s32.totalorder %s42, %s45
      %p54 = scmp.eq.s32.totalorder %s37, 1
      %p55 = por %p53, %p54
      %p56 = scmp.ne.s32.totalorder %s45, %s46
      %p57 = scmp.eq.s32.totalorder %s37, 0
      %p58 = por %p56, %p57
      %p59 = scmp.ne.s32.totalorder %s45, %s46
      %p60 = scmp.eq.s32.totalorder %s38, 1
      %p61 = por %p59, %p60
      %p63 = scmp.ne.s32.totalorder %s46, %s62
      %p64 = scmp.eq.s32.totalorder %s38, 0
      %p65 = por %p63, %p64
      %s67 = sadd.s32 %s66, 1
      %p70 = scmp.eq.s32.totalorder %s32, 1
      %p71 = scmp.ne.s32.totalorder %s66, %s68
      %p72 = scmp.eq.s32.totalorder %s32, 0
      %p73 = por %p71, %p72
      %p74 = scmp.ne.s32.totalorder %s66, %s68
      %p75 = scmp.eq.s32.totalorder %s37, 1
      %p76 = por %p74, %p75
      %p77 = scmp.ne.s32.totalorder %s68, %s69
      %p78 = scmp.eq.s32.totalorder %s37, 0
      %p79 = por %p77, %p78
      %p80 = scmp.ne.s32.totalorder %s68, %s69
      %p81 = scmp.eq.s32.totalorder %s38, 1
      %p82 = por %p80, %p81
      %p84 = scmp.ne.s32.totalorder %s69, %s83
      %p85 = scmp.eq.s32.totalorder %s38, 0
      %p86 = por %p84, %p85
      %s88 = sadd.s32 %s87, 1
      %p91 = scmp.eq.s32.totalorder %s32, 1
      %p92 = scmp.ne.s32.totalorder %s87, %s89
      %p93 = scmp.eq.s32.totalorder %s32, 0
      %p94 = por %p92, %p93
      %p95 = scmp.ne.s32.totalorder %s87, %s89
      %p96 = scmp.eq.s32.totalorder %s37, 1
      %p97 = por %p95, %p96
      %p98 = scmp.ne.s32.totalorder %s89, %s90
      %p99 = scmp.eq.s32.totalorder %s37, 0
      %p100 = por %p98, %p99
      %p101 = scmp.ne.s32.totalorder %s89, %s90
      %p102 = scmp.eq.s32.totalorder %s38, 1
      %p103 = por %p101, %p102
      %p105 = scmp.ne.s32.totalorder %s90, %s104
      %p106 = scmp.eq.s32.totalorder %s38, 0
      %p107 = por %p105, %p106
      %s109 = sadd.s32 %s108, 1
      %p112 = scmp.eq.s32.totalorder %s32, 1
      %p113 = scmp.ne.s32.totalorder %s108, %s110
      %p114 = scmp.eq.s32.totalorder %s32, 0
      %p115 = por %p113, %p114
      %p116 = scmp.ne.s32.totalorder %s108, %s110
      %p117 = scmp.eq.s32.totalorder %s37, 1
      %p118 = por %p116, %p117
      %p119 = scmp.ne.s32.totalorder %s110, %s111
      %p120 = scmp.eq.s32.totalorder %s37, 0
      %p121 = por %p119, %p120
      %p122 = scmp.ne.s32.totalorder %s110, %s111
      %p123 = scmp.eq.s32.totalorder %s38, 1
      %p124 = por %p122, %p123
      %p126 = scmp.ne.s32.totalorder %s111, %s125
      %p127 = scmp.eq.s32.totalorder %s38, 0
      %p128 = por %p126, %p127
      %s130 = sadd.s32 %s129, 1
      %p133 = scmp.eq.s32.totalorder %s32, 1
      %p134 = scmp.ne.s32.totalorder %s129, %s131
      %p135 = scmp.eq.s32.totalorder %s32, 0
      %p136 = por %p134, %p135
      %p137 = scmp.ne.s32.totalorder %s129, %s131
      %p138 = scmp.eq.s32.totalorder %s37, 1
      %p139 = por %p137, %p138
      %p140 = scmp.ne.s32.totalorder %s131, %s132
      %p141 = scmp.eq.s32.totalorder %s37, 0
      %p142 = por %p140, %p141
      %p143 = scmp.ne.s32.totalorder %s131, %s132
      %p144 = scmp.eq.s32.totalorder %s38, 1
      %p145 = por %p143, %p144
      %p147 = scmp.ne.s32.totalorder %s132, %s146
      %p148 = scmp.eq.s32.totalorder %s38, 0
      %p149 = por %p147, %p148
      %s151 = sadd.s32 %s150, 1
      %p154 = scmp.eq.s32.totalorder %s32, 1
      %p155 = scmp.ne.s32.totalorder %s150, %s152
      %p156 = scmp.eq.s32.totalorder %s32, 0
      %p157 = por %p155, %p156
      %p158 = scmp.ne.s32.totalorder %s150, %s152
      %p159 = scmp.eq.s32.totalorder %s37, 1
      %p160 = por %p158, %p159
      %p161 = scmp.ne.s32.totalorder %s152, %s153
      %p162 = scmp.eq.s32.totalorder %s37, 0
      %p163 = por %p161, %p162
      %p164 = scmp.ne.s32.totalorder %s152, %s153
      %p165 = scmp.eq.s32.totalorder %s38, 1
      %p166 = por %p164, %p165
      %p168 = scmp.ne.s32.totalorder %s153, %s167
      %p169 = scmp.eq.s32.totalorder %s38, 0
      %p170 = por %p168, %p169
      %s172 = sadd.s32 %s171, 1
      %p175 = scmp.eq.s32.totalorder %s32, 1
      %p176 = scmp.ne.s32.totalorder %s171, %s173
      %p177 = scmp.eq.s32.totalorder %s32, 0
      %p178 = por %p176, %p177
      %p179 = scmp.ne.s32.totalorder %s171, %s173
      %p180 = scmp.eq.s32.totalorder %s37, 1
      %p181 = por %p179, %p180
      %p182 = scmp.ne.s32.totalorder %s173, %s174
      %p183 = scmp.eq.s32.totalorder %s37, 0
      %p184 = por %p182, %p183
      %p185 = scmp.ne.s32.totalorder %s173, %s174
      %p186 = scmp.eq.s32.totalorder %s38, 1
      %p187 = por %p185, %p186
      %p189 = scmp.ne.s32.totalorder %s174, %s188
      %p190 = scmp.eq.s32.totalorder %s38, 0
      %p191 = por %p189, %p190
      %s193 = sadd.s32 %s192, 1
      %p196 = scmp.eq.s32.totalorder %s32, 1
      %p197 = scmp.ne.s32.totalorder %s192, %s194
      %p198 = scmp.eq.s32.totalorder %s32, 0
      %p199 = por %p197, %p198
      %p200 = scmp.ne.s32.totalorder %s192, %s194
      %p201 = scmp.eq.s32.totalorder %s37, 1
      %p202 = por %p200, %p201
      %p203 = scmp.ne.s32.totalorder %s194, %s195
      %p204 = scmp.eq.s32.totalorder %s37, 0
      %p205 = por %p203, %p204
      %p206 = scmp.ne.s32.totalorder %s194, %s195
      %p207 = scmp.eq.s32.totalorder %s38, 1
      %p208 = por %p206, %p207
      %p210 = scmp.ne.s32.totalorder %s195, %s209
      %p211 = scmp.eq.s32.totalorder %s38, 0
      %p212 = por %p210, %p211
      %s214 = sadd.s32 %s213, 1
      %p217 = scmp.eq.s32.totalorder %s32, 1
      %p218 = scmp.ne.s32.totalorder %s213, %s215
      %p219 = scmp.eq.s32.totalorder %s32, 0
      %p220 = por %p218, %p219
      %p221 = scmp.ne.s32.totalorder %s213, %s215
      %p222 = scmp.eq.s32.totalorder %s37, 1
      %p223 = por %p221, %p222
      %p224 = scmp.ne.s32.totalorder %s215, %s216
      %p225 = scmp.eq.s32.totalorder %s37, 0
      %p226 = por %p224, %p225
      %p227 = scmp.ne.s32.totalorder %s215, %s216
      %p228 = scmp.eq.s32.totalorder %s38, 1
      %p229 = por %p227, %p228
      %p231 = scmp.ne.s32.totalorder %s216, %s230
      %p232 = scmp.eq.s32.totalorder %s38, 0
      %p233 = por %p231, %p232
      %s235 = sadd.s32 %s234, 1
      %p238 = scmp.eq.s32.totalorder %s32, 1
      %p239 = scmp.ne.s32.totalorder %s234, %s236
      %p240 = scmp.eq.s32.totalorder %s32, 0
      %p241 = por %p239, %p240
      %p242 = scmp.ne.s32.totalorder %s234, %s236
      %p243 = scmp.eq.s32.totalorder %s37, 1
      %p244 = por %p242, %p243
      %p245 = scmp.ne.s32.totalorder %s236, %s237
      %p246 = scmp.eq.s32.totalorder %s37, 0
      %p247 = por %p245, %p246
      %p248 = scmp.ne.s32.totalorder %s236, %s237
      %p249 = scmp.eq.s32.totalorder %s38, 1
      %p250 = por %p248, %p249
      %p252 = scmp.ne.s32.totalorder %s237, %s251
      %p253 = scmp.eq.s32.totalorder %s38, 0
      %p254 = por %p252, %p253
      %s256 = sadd.s32 %s255, 1
      %p259 = scmp.eq.s32.totalorder %s32, 1
      %p260 = scmp.ne.s32.totalorder %s255, %s257
      %p261 = scmp.eq.s32.totalorder %s32, 0
      %p262 = por %p260, %p261
      %p263 = scmp.ne.s32.totalorder %s255, %s257
      %p264 = scmp.eq.s32.totalorder %s37, 1
      %p265 = por %p263, %p264
      %p266 = scmp.ne.s32.totalorder %s257, %s258
      %p267 = scmp.eq.s32.totalorder %s37, 0
      %p268 = por %p266, %p267
      %p269 = scmp.ne.s32.totalorder %s257, %s258
      %p270 = scmp.eq.s32.totalorder %s38, 1
      %p271 = por %p269, %p270
      %p273 = scmp.ne.s32.totalorder %s258, %s272
      %p274 = scmp.eq.s32.totalorder %s38, 0
      %p275 = por %p273, %p274
      %s277 = sadd.s32 %s276, 1
      %p280 = scmp.eq.s32.totalorder %s32, 1
      %p281 = scmp.ne.s32.totalorder %s276, %s278
      %p282 = scmp.eq.s32.totalorder %s32, 0
      %p283 = por %p281, %p282
      %p284 = scmp.ne.s32.totalorder %s276, %s278
      %p285 = scmp.eq.s32.totalorder %s37, 1
      %p286 = por %p284, %p285
      %p287 = scmp.ne.s32.totalorder %s278, %s279
      %p288 = scmp.eq.s32.totalorder %s37, 0
      %p289 = por %p287, %p288
      %p290 = scmp.ne.s32.totalorder %s278, %s279
      %p291 = scmp.eq.s32.totalorder %s38, 1
      %p292 = por %p290, %p291
      %p294 = scmp.ne.s32.totalorder %s279, %s293
      %p295 = scmp.eq.s32.totalorder %s38, 0
      %p296 = por %p294, %p295
      %s298 = sadd.s32 %s297, 1
      %p301 = scmp.eq.s32.totalorder %s32, 1
      %p302 = scmp.ne.s32.totalorder %s297, %s299
      %p303 = scmp.eq.s32.totalorder %s32, 0
      %p304 = por %p302, %p303
      %p305 = scmp.ne.s32.totalorder %s297, %s299
      %p306 = scmp.eq.s32.totalorder %s37, 1
      %p307 = por %p305, %p306
      %p308 = scmp.ne.s32.totalorder %s299, %s300
      %p309 = scmp.eq.s32.totalorder %s37, 0
      %p310 = por %p308, %p309
      %p311 = scmp.ne.s32.totalorder %s299, %s300
      %p312 = scmp.eq.s32.totalorder %s38, 1
      %p313 = por %p311, %p312
      %p315 = scmp.ne.s32.totalorder %s300, %s314
      %p316 = scmp.eq.s32.totalorder %s38, 0
      %p317 = por %p315, %p316
      %s319 = sadd.s32 %s318, 1
      %p322 = scmp.eq.s32.totalorder %s32, 1
      %p323 = scmp.ne.s32.totalorder %s318, %s320
      %p324 = scmp.eq.s32.totalorder %s32, 0
      %p325 = por %p323, %p324
      %p326 = scmp.ne.s32.totalorder %s318, %s320
      %p327 = scmp.eq.s32.totalorder %s37, 1
      %p328 = por %p326, %p327
      %p329 = scmp.ne.s32.totalorder %s320, %s321
      %p330 = scmp.eq.s32.totalorder %s37, 0
      %p331 = por %p329, %p330
      %p332 = scmp.ne.s32.totalorder %s320, %s321
      %p333 = scmp.eq.s32.totalorder %s38, 1
      %p334 = por %p332, %p333
      %p336 = scmp.ne.s32.totalorder %s321, %s335
      %p337 = scmp.eq.s32.totalorder %s38, 0
      %p338 = por %p336, %p337
      %s340 = sadd.s32 %s339, 1
      %p343 = scmp.eq.s32.totalorder %s32, 1
      %p344 = scmp.ne.s32.totalorder %s339, %s341
      %p345 = scmp.eq.s32.totalorder %s32, 0
      %p346 = por %p344, %p345
      %p347 = scmp.ne.s32.totalorder %s339, %s341
      %p348 = scmp.eq.s32.totalorder %s37, 1
      %p349 = por %p347, %p348
      %p350 = scmp.ne.s32.totalorder %s341, %s342
      %p351 = scmp.eq.s32.totalorder %s37, 0
      %p352 = por %p350, %p351
      %p353 = scmp.ne.s32.totalorder %s341, %s342
      %p354 = scmp.eq.s32.totalorder %s38, 1
      %p355 = por %p353, %p354
      %p357 = scmp.ne.s32.totalorder %s342, %s356
      %p358 = scmp.eq.s32.totalorder %s38, 0
      %p359 = por %p357, %p358
      %s361 = sadd.s32 %s360, 1
      %p364 = scmp.eq.s32.totalorder %s32, 1
      %p365 = scmp.ne.s32.totalorder %s360, %s362
      %p366 = scmp.eq.s32.totalorder %s32, 0
      %p367 = por %p365, %p366
      %p368 = scmp.ne.s32.totalorder %s360, %s362
      %p369 = scmp.eq.s32.totalorder %s37, 1
      %p370 = por %p368, %p369
      %p371 = scmp.ne.s32.totalorder %s362, %s363
      %p372 = scmp.eq.s32.totalorder %s37, 0
      %p373 = por %p371, %p372
      %p374 = scmp.ne.s32.totalorder %s362, %s363
      %p375 = scmp.eq.s32.totalorder %s38, 1
      %p376 = por %p374, %p375
      %p378 = scmp.ne.s32.totalorder %s363, %s377
      %p379 = scmp.eq.s32.totalorder %s38, 0
      %p380 = por %p378, %p379
      %s382 = sadd.s32 %s381, 1
      %p385 = scmp.eq.s32.totalorder %s32, 1
      %p386 = scmp.ne.s32.totalorder %s381, %s383
      %p387 = scmp.eq.s32.totalorder %s32, 0
      %p388 = por %p386, %p387
      %p389 = scmp.ne.s32.totalorder %s381, %s383
      %p390 = scmp.eq.s32.totalorder %s37, 1
      %p391 = por %p389, %p390
      %p392 = scmp.ne.s32.totalorder %s383, %s384
      %p393 = scmp.eq.s32.totalorder %s37, 0
      %p394 = por %p392, %p393
      %p395 = scmp.ne.s32.totalorder %s383, %s384
      %p396 = scmp.eq.s32.totalorder %s38, 1
      %p397 = por %p395, %p396
      %p399 = scmp.ne.s32.totalorder %s384, %s398
      %p400 = scmp.eq.s32.totalorder %s38, 0
      %p401 = por %p399, %p400
      %s402 = ssub.s32 %s32, %s39
      %p403 = scmp.eq.s32.totalorder %s402, 0
      %s405 = sadd.s32 %s404, 1
      %s406 = scalar_select %p403, %s404, %s405
      %p409 = pneg %p403
      %p410 = scmp.eq.s32.totalorder %s32, 1
      %p411 = por %p409, %p410
      %p412 = scmp.ne.s32.totalorder %s404, %s407
      %p413 = scmp.eq.s32.totalorder %s32, 0
      %p414 = por %p412, %p413
      %p415 = scmp.ne.s32.totalorder %s404, %s407
      %p416 = scmp.eq.s32.totalorder %s37, 1
      %p417 = por %p415, %p416
      %p418 = scmp.ne.s32.totalorder %s407, %s408
      %p419 = scmp.eq.s32.totalorder %s37, 0
      %p420 = por %p418, %p419
      %p421 = scmp.ne.s32.totalorder %s407, %s408
      %p422 = scmp.eq.s32.totalorder %s38, 1
      %p423 = por %p421, %p422
      %p425 = scmp.ne.s32.totalorder %s408, %s424
      %p426 = scmp.eq.s32.totalorder %s38, 0
      %p427 = por %p425, %p426
      %p428 = scmp.le.s32.totalorder 1, %s32
      %p429 = scmp.lt.s32.totalorder %s32, 3
      %p430 = pnand %p428, %p429
      %p431 = pneg %p430
      // Predicated region
      $region9: #{tpu_custom_call.1} parent=5 // pred_check
        _
      $region10: #{tpu_custom_call.1} parent=5 // pred_check_branch
        %433 = sbr.rel (%p430) target = $region12
      $region11: #{tpu_custom_call.1} parent=5 // pred_region
        %s434 = ssub.s32 %s32, 1
        // Predicated region
        $region13: #{tpu_custom_call.1} parent=11 // pred_check
          %p435 = pneg %p79
        $region14: #{tpu_custom_call.1} parent=11 // pred_check_branch
          %437 = sbr.rel (%p435) target = $region16
        $region15: #{tpu_custom_call.1} parent=11 // pred_region
          %439 = vsyncadd [#allocation7], 0
          %s440 = sshll.u32 %s1, 4
          %s441 = int_to_ptr.hbm [resolvable:$true] %s440
          %s442 = sshll.u32 [#allocation6], 4
          %s443 = int_to_ptr.vmem [resolvable:$true] %s442
          %448 = dma.hbm_to_vmem [thread:$0]  %s441, 1024, %s443, [#allocation7], 64, 64, 4
        $region16: #{tpu_custom_call.1} parent=11 // pred_fallthru
          _
        // Predicated region
        $region17: #{tpu_custom_call.1} parent=11 // pred_check
          %p449 = pneg %p100
        $region18: #{tpu_custom_call.1} parent=11 // pred_check_branch
          %451 = sbr.rel (%p449) target = $region20
        $region19: #{tpu_custom_call.1} parent=11 // pred_region
          %453 = vsyncadd [#allocation7], 0
          %s454 = sshll.u32 %s2, 4
          %s455 = int_to_ptr.hbm [resolvable:$true] %s454
          %s456 = sshll.u32 [#allocation8], 4
          %s457 = int_to_ptr.vmem [resolvable:$true] %s456
          %462 = dma.hbm_to_vmem [thread:$0]  %s455, 1024, %s457, [#allocation7], 64, 64, 4
        $region20: #{tpu_custom_call.1} parent=11 // pred_fallthru
          _
        // Predicated region
        $region21: #{tpu_custom_call.1} parent=11 // pred_check
          %p463 = pneg %p121
        $region22: #{tpu_custom_call.1} parent=11 // pred_check_branch
          %465 = sbr.rel (%p463) target = $region24
        $region23: #{tpu_custom_call.1} parent=11 // pred_region
          %467 = vsyncadd [#allocation10], 0
          %s468 = sshll.u32 %s3, 4
          %s469 = int_to_ptr.hbm [resolvable:$true] %s468
          %s470 = sshll.u32 [#allocation9], 4
          %s471 = int_to_ptr.vmem [resolvable:$true] %s470
          %476 = dma.hbm_to_vmem [thread:$0]  %s469, 1024, %s471, [#allocation10], 64, 64, 4
        $region24: #{tpu_custom_call.1} parent=11 // pred_fallthru
          _
        // Predicated region
        $region25: #{tpu_custom_call.1} parent=11 // pred_check
          %p477 = pneg %p142
        $region26: #{tpu_custom_call.1} parent=11 // pred_check_branch
          %479 = sbr.rel (%p477) target = $region28
        $region27: #{tpu_custom_call.1} parent=11 // pred_region
          _
        $region28: #{tpu_custom_call.1} parent=11 // pred_fallthru
          _
        // Predicated region
        $region29: #{tpu_custom_call.1} parent=11 // pred_check
          %p480 = pneg %p163
        $region30: #{tpu_custom_call.1} parent=11 // pred_check_branch
          %482 = sbr.rel (%p480) target = $region32
        $region31: #{tpu_custom_call.1} parent=11 // pred_region
          _
        $region32: #{tpu_custom_call.1} parent=11 // pred_fallthru
          _
        // Predicated region
        $region33: #{tpu_custom_call.1} parent=11 // pred_check
          %p483 = pneg %p184
        $region34: #{tpu_custom_call.1} parent=11 // pred_check_branch
          %485 = sbr.rel (%p483) target = $region36
        $region35: #{tpu_custom_call.1} parent=11 // pred_region
          _
        $region36: #{tpu_custom_call.1} parent=11 // pred_fallthru
          _
        // Predicated region
        $region37: #{tpu_custom_call.1} parent=11 // pred_check
          %p486 = pneg %p205
        $region38: #{tpu_custom_call.1} parent=11 // pred_check_branch
          %488 = sbr.rel (%p486) target = $region40
        $region39: #{tpu_custom_call.1} parent=11 // pred_region
          %490 = vsyncadd [#allocation10], 0
          %s491 = sshll.u32 %s7, 4
          %s492 = int_to_ptr.hbm [resolvable:$true] %s491
          %s493 = sshll.u32 [#allocation11], 4
          %s494 = int_to_ptr.vmem [resolvable:$true] %s493
          %499 = dma.hbm_to_vmem [thread:$0]  %s492, 1024, %s494, [#allocation10], 64, 64, 4
        $region40: #{tpu_custom_call.1} parent=11 // pred_fallthru
          _
        // Predicated region
        $region41: #{tpu_custom_call.1} parent=11 // pred_check
          %p500 = pneg %p226
        $region42: #{tpu_custom_call.1} parent=11 // pred_check_branch
          %502 = sbr.rel (%p500) target = $region44
        $region43: #{tpu_custom_call.1} parent=11 // pred_region
          _
        $region44: #{tpu_custom_call.1} parent=11 // pred_fallthru
          _
        // Predicated region
        $region45: #{tpu_custom_call.1} parent=11 // pred_check
          %p503 = pneg %p247
        $region46: #{tpu_custom_call.1} parent=11 // pred_check_branch
          %505 = sbr.rel (%p503) target = $region48
        $region47: #{tpu_custom_call.1} parent=11 // pred_region
          _
        $region48: #{tpu_custom_call.1} parent=11 // pred_fallthru
          _
        // Predicated region
        $region49: #{tpu_custom_call.1} parent=11 // pred_check
          %p506 = pneg %p268
        $region50: #{tpu_custom_call.1} parent=11 // pred_check_branch
          %508 = sbr.rel (%p506) target = $region52
        $region51: #{tpu_custom_call.1} parent=11 // pred_region
          _
        $region52: #{tpu_custom_call.1} parent=11 // pred_fallthru
          _
        // Predicated region
        $region53: #{tpu_custom_call.1} parent=11 // pred_check
          %p509 = pneg %p289
        $region54: #{tpu_custom_call.1} parent=11 // pred_check_branch
          %511 = sbr.rel (%p509) target = $region56
        $region55: #{tpu_custom_call.1} parent=11 // pred_region
          %513 = vsyncadd [#allocation13], 0
          %s514 = sshll.u32 %s11, 4
          %s515 = int_to_ptr.hbm [resolvable:$true] %s514
          %s516 = sshll.u32 [#allocation12], 4
          %s517 = int_to_ptr.vmem [resolvable:$true] %s516
          %522 = dma.hbm_to_vmem [thread:$0]  %s515, 2048, %s517, [#allocation13], 128, 128, 8
        $region56: #{tpu_custom_call.1} parent=11 // pred_fallthru
          _
        // Predicated region
        $region57: #{tpu_custom_call.1} parent=11 // pred_check
          %p523 = pneg %p310
        $region58: #{tpu_custom_call.1} parent=11 // pred_check_branch
          %525 = sbr.rel (%p523) target = $region60
        $region59: #{tpu_custom_call.1} parent=11 // pred_region
          _
        $region60: #{tpu_custom_call.1} parent=11 // pred_fallthru
          _
        // Predicated region
        $region61: #{tpu_custom_call.1} parent=11 // pred_check
          %p526 = pneg %p331
        $region62: #{tpu_custom_call.1} parent=11 // pred_check_branch
          %528 = sbr.rel (%p526) target = $region64
        $region63: #{tpu_custom_call.1} parent=11 // pred_region
          %530 = vsyncadd [#allocation13], 0
          %s531 = sshll.u32 %s13, 4
          %s532 = int_to_ptr.hbm [resolvable:$true] %s531
          %s533 = sshll.u32 [#allocation14], 4
          %s534 = int_to_ptr.vmem [resolvable:$true] %s533
          %539 = dma.hbm_to_vmem [thread:$0]  %s532, 2048, %s534, [#allocation13], 64, 64, 4
        $region64: #{tpu_custom_call.1} parent=11 // pred_fallthru
          _
        // Predicated region
        $region65: #{tpu_custom_call.1} parent=11 // pred_check
          %p540 = pneg %p352
        $region66: #{tpu_custom_call.1} parent=11 // pred_check_branch
          %542 = sbr.rel (%p540) target = $region68
        $region67: #{tpu_custom_call.1} parent=11 // pred_region
          _
        $region68: #{tpu_custom_call.1} parent=11 // pred_fallthru
          _
        // Predicated region
        $region69: #{tpu_custom_call.1} parent=11 // pred_check
          %p543 = pneg %p373
        $region70: #{tpu_custom_call.1} parent=11 // pred_check_branch
          %545 = sbr.rel (%p543) target = $region72
        $region71: #{tpu_custom_call.1} parent=11 // pred_region
          _
        $region72: #{tpu_custom_call.1} parent=11 // pred_fallthru
          _
        // Predicated region
        $region73: #{tpu_custom_call.1} parent=11 // pred_check
          %p546 = pneg %p394
        $region74: #{tpu_custom_call.1} parent=11 // pred_check_branch
          %548 = sbr.rel (%p546) target = $region76
        $region75: #{tpu_custom_call.1} parent=11 // pred_region
          _
        $region76: #{tpu_custom_call.1} parent=11 // pred_fallthru
          _
      $region12: #{tpu_custom_call.1} parent=5 // pred_fallthru
        _
      %p549 = scmp.lt.s32.totalorder %s32, 2
      // Predicated region
      $region77: #{tpu_custom_call.1} parent=5 // pred_check
        %p550 = pneg %p549
      $region78: #{tpu_custom_call.1} parent=5 // pred_check_branch
        %552 = sbr.rel (%p550) target = $region80
      $region79: #{tpu_custom_call.1} parent=5 // pred_region
        // Predicated region
        $region81: #{tpu_custom_call.1} parent=79 // pred_check
          %p553 = pneg %p52
        $region82: #{tpu_custom_call.1} parent=79 // pred_check_branch
          %555 = sbr.rel (%p553) target = $region84
        $region83: #{tpu_custom_call.1} parent=79 // pred_region
          %s556 = sand.u32 %s42, 1
          %s557 = scalar_lea.sflag [#allocation4], %s556
          %s558 = sand.u32 %s42, 1
          %s559 = smul.addr %s558, 8
          %s560 = scalar_lea.vmem [#allocation3], %s559
          %562 = vsyncadd %s557, 0
          %s563 = smul.addr %s32, 8
          %s564 = scalar_lea.hbm %s0, %s563
          %s566 = sshll.u32 %s564, 4
          %s567 = int_to_ptr.hbm [resolvable:$true] %s566
          %s568 = sshll.u32 %s560, 4
          %s569 = int_to_ptr.vmem [resolvable:$true] %s568
          %571 = dma.hbm_to_vmem [thread:$0]  %s567, 128, %s569, %s557
        $region84: #{tpu_custom_call.1} parent=79 // pred_fallthru
          _
      $region80: #{tpu_custom_call.1} parent=5 // pred_fallthru
        _
      %p572 = scmp.le.s32.totalorder 1, %s32
      %p573 = scmp.lt.s32.totalorder %s32, 3
      %p574 = pnand %p572, %p573
      %p575 = pneg %p574
      // Predicated region
      $region85: #{tpu_custom_call.1} parent=5 // pred_check
        _
      $region86: #{tpu_custom_call.1} parent=5 // pred_check_branch
        %577 = sbr.rel (%p574) target = $region88
      $region87: #{tpu_custom_call.1} parent=5 // pred_region
        %s578 = ssub.s32 %s32, 1
        %s579 = sand.u32 %s45, 1
        %s580 = scalar_lea.sflag [#allocation4], %s579
        %s581 = sand.u32 %s45, 1
        %s582 = smul.addr %s581, 8
        %s583 = scalar_lea.vmem [#allocation3], %s582
        // Predicated region
        $region89: #{tpu_custom_call.1} parent=87 // pred_check
          %p584 = pneg %p58
        $region90: #{tpu_custom_call.1} parent=87 // pred_check_branch
          %586 = sbr.rel (%p584) target = $region92
        $region91: #{tpu_custom_call.1} parent=87 // pred_region
          %588 = dma.done %s580, 128
        $region92: #{tpu_custom_call.1} parent=87 // pred_fallthru
          _
        // Predicated region
        $region93: #{tpu_custom_call.1} parent=87 // pred_check
          %p589 = pneg %p79
        $region94: #{tpu_custom_call.1} parent=87 // pred_check_branch
          %591 = sbr.rel (%p589) target = $region96
        $region95: #{tpu_custom_call.1} parent=87 // pred_region
          %593 = dma.done [#allocation7], 1024
        $region96: #{tpu_custom_call.1} parent=87 // pred_fallthru
          _
        // Predicated region
        $region97: #{tpu_custom_call.1} parent=87 // pred_check
          %p594 = pneg %p100
        $region98: #{tpu_custom_call.1} parent=87 // pred_check_branch
          %596 = sbr.rel (%p594) target = $region100
        $region99: #{tpu_custom_call.1} parent=87 // pred_region
          %598 = dma.done [#allocation7], 1024
        $region100: #{tpu_custom_call.1} parent=87 // pred_fallthru
          _
        // Predicated region
        $region101: #{tpu_custom_call.1} parent=87 // pred_check
          %p599 = pneg %p121
        $region102: #{tpu_custom_call.1} parent=87 // pred_check_branch
          %601 = sbr.rel (%p599) target = $region104
        $region103: #{tpu_custom_call.1} parent=87 // pred_region
          %603 = dma.done [#allocation10], 1024
        $region104: #{tpu_custom_call.1} parent=87 // pred_fallthru
          _
        // Predicated region
        $region105: #{tpu_custom_call.1} parent=87 // pred_check
          %p604 = pneg %p205
        $region106: #{tpu_custom_call.1} parent=87 // pred_check_branch
          %606 = sbr.rel (%p604) target = $region108
        $region107: #{tpu_custom_call.1} parent=87 // pred_region
          %608 = dma.done [#allocation10], 1024
        $region108: #{tpu_custom_call.1} parent=87 // pred_fallthru
          _
        // Predicated region
        $region109: #{tpu_custom_call.1} parent=87 // pred_check
          %p609 = pneg %p289
        $region110: #{tpu_custom_call.1} parent=87 // pred_check_branch
          %611 = sbr.rel (%p609) target = $region112
        $region111: #{tpu_custom_call.1} parent=87 // pred_region
          %613 = dma.done [#allocation13], 2048
        $region112: #{tpu_custom_call.1} parent=87 // pred_fallthru
          _
        // Predicated region
        $region113: #{tpu_custom_call.1} parent=87 // pred_check
          %p614 = pneg %p331
        $region114: #{tpu_custom_call.1} parent=87 // pred_check_branch
          %616 = sbr.rel (%p614) target = $region116
        $region115: #{tpu_custom_call.1} parent=87 // pred_region
          %618 = dma.done [#allocation13], 2048
        $region116: #{tpu_custom_call.1} parent=87 // pred_fallthru
          _
        %s619 = sand.u32 %s45, 1
        %s620 = scalar_lea.sflag [#allocation4], %s619
        %s621 = sand.u32 %s45, 1
        %s622 = smul.addr %s621, 8
        %s623 = scalar_lea.vmem [#allocation3], %s622
        %p624 = pneg %p58
        %p625 = pneg %p55
        %p626 = pneg %p79
        %p627 = pneg %p76
        %p628 = pneg %p100
        %p629 = pneg %p97
        %p630 = pneg %p121
        %p631 = pneg %p118
        %p632 = pneg %p142
        %p633 = pneg %p139
        %p634 = pneg %p163
        %p635 = pneg %p160
        %p636 = pneg %p184
        %p637 = pneg %p181
        %p638 = pneg %p205
        %p639 = pneg %p202
        %p640 = pneg %p226
        %p641 = pneg %p223
        %p642 = pneg %p247
        %p643 = pneg %p244
        %p644 = pneg %p268
        %p645 = pneg %p265
        %p646 = pneg %p289
        %p647 = pneg %p286
        %p648 = pneg %p310
        %p649 = pneg %p307
        %p650 = pneg %p331
        %p651 = pneg %p328
        %p652 = pneg %p352
        %p653 = pneg %p349
        %p654 = pneg %p373
        %p655 = pneg %p370
        %p656 = pneg %p394
        %p657 = pneg %p391
        %p658 = pneg %p420
        %p659 = pneg %p417
        %s660 = sand.u32 %s407, 1
        %s661 = scalar_lea.sflag [#allocation5], %s660
        %s662 = sand.u32 %s407, 1
        %s663 = smul.addr %s662, 8
        %s664 = scalar_lea.vmem [#allocation15], %s663
        %v666 = vld [vmem:[%s583] sm:$0xff]
        %v667 = vpack.c.bf16 %v666, %v666
        %v668 = vld [vmem:[#allocation6] sm:$0xf]
        %v669 = vld [vmem:[#allocation6 + $0x4] sm:$0xf]
        %v670 = vld [vmem:[#allocation6 + $0x8] sm:$0xf]
        %v671 = vld [vmem:[#allocation6 + $0xc] sm:$0xf]
        %v672 = vld [vmem:[#allocation6 + $0x10] sm:$0xf]
        %v673 = vld [vmem:[#allocation6 + $0x14] sm:$0xf]
        %v674 = vld [vmem:[#allocation6 + $0x18] sm:$0xf]
        %v675 = vld [vmem:[#allocation6 + $0x1c] sm:$0xf]
        %v676 = vld [vmem:[#allocation6 + $0x20] sm:$0xf]
        %v677 = vld [vmem:[#allocation6 + $0x24] sm:$0xf]
        %v678 = vld [vmem:[#allocation6 + $0x28] sm:$0xf]
        %v679 = vld [vmem:[#allocation6 + $0x2c] sm:$0xf]
        %v680 = vld [vmem:[#allocation6 + $0x30] sm:$0xf]
        %v681 = vld [vmem:[#allocation6 + $0x34] sm:$0xf]
        %v682 = vld [vmem:[#allocation6 + $0x38] sm:$0xf]
        %v683 = vld [vmem:[#allocation6 + $0x3c] sm:$0xf]
        %v684 = vld [vmem:[%s4] sm:$0x1]
        %v686 = vperm.slane %v684, 0
        %v704 = vunpack.c.l.b16 %v668
        %v705 = vunpack.c.l.b16 %v669
        %v706 = vunpack.c.l.b16 %v670
        %v707 = vunpack.c.l.b16 %v671
        %v708 = vunpack.c.l.b16 %v672
        %v709 = vunpack.c.l.b16 %v673
        %v710 = vunpack.c.l.b16 %v674
        %v711 = vunpack.c.l.b16 %v675
        %v712 = vunpack.c.l.b16 %v676
        %v713 = vunpack.c.l.b16 %v677
        %v714 = vunpack.c.l.b16 %v678
        %v715 = vunpack.c.l.b16 %v679
        %v716 = vunpack.c.l.b16 %v680
        %v717 = vunpack.c.l.b16 %v681
        %v718 = vunpack.c.l.b16 %v682
        %v719 = vunpack.c.l.b16 %v683
        %v720 = vpack.c.b16 %v705, %v704
        %v721 = vpack.c.b16 %v707, %v706
        %v722 = vpack.c.b16 %v709, %v708
        %v723 = vpack.c.b16 %v711, %v710
        %v724 = vpack.c.b16 %v713, %v712
        %v725 = vpack.c.b16 %v715, %v714
        %v726 = vpack.c.b16 %v717, %v716
        %v727 = vpack.c.b16 %v719, %v718
        %736 = vmatpush.bf16.msra.mxu0 %v727
        %737 = vmatpush.bf16.msra.mxu0 %v726
        %738 = vmatpush.bf16.msra.mxu0 %v725
        %739 = vmatpush.bf16.msra.mxu0 %v724
        %740 = vmatpush.bf16.msra.mxu0 %v723
        %741 = vmatpush.bf16.msra.mxu0 %v722
        %742 = vmatpush.bf16.msra.mxu0 %v721
        %743 = vmatpush.bf16.msra.mxu0 %v720
        %744 = vmatmul.bf16.gmra.mxu0 %v667
        %v745 = vpop.f32.mrf.mxu0
        %v746 = vadd.f32 %v686, %v745
        %v747 = vpop.f32.mrf.mxu0
        %748 = vdwg.mxu0
        %v749 = vld [vmem:[#allocation8] sm:$0xf]
        %v750 = vld [vmem:[#allocation8 + $0x4] sm:$0xf]
        %v751 = vld [vmem:[#allocation8 + $0x8] sm:$0xf]
        %v752 = vld [vmem:[#allocation8 + $0xc] sm:$0xf]
        %v753 = vld [vmem:[#allocation8 + $0x10] sm:$0xf]
        %v754 = vld [vmem:[#allocation8 + $0x14] sm:$0xf]
        %v755 = vld [vmem:[#allocation8 + $0x18] sm:$0xf]
        %v756 = vld [vmem:[#allocation8 + $0x1c] sm:$0xf]
        %v757 = vld [vmem:[#allocation8 + $0x20] sm:$0xf]
        %v758 = vld [vmem:[#allocation8 + $0x24] sm:$0xf]
        %v759 = vld [vmem:[#allocation8 + $0x28] sm:$0xf]
        %v760 = vld [vmem:[#allocation8 + $0x2c] sm:$0xf]
        %v761 = vld [vmem:[#allocation8 + $0x30] sm:$0xf]
        %v762 = vld [vmem:[#allocation8 + $0x34] sm:$0xf]
        %v763 = vld [vmem:[#allocation8 + $0x38] sm:$0xf]
        %v764 = vld [vmem:[#allocation8 + $0x3c] sm:$0xf]
        %v765 = vld [vmem:[%s5] sm:$0x1]
        %v767 = vperm.slane %v765, 0
        %v785 = vunpack.c.l.b16 %v749
        %v786 = vunpack.c.l.b16 %v750
        %v787 = vunpack.c.l.b16 %v751
        %v788 = vunpack.c.l.b16 %v752
        %v789 = vunpack.c.l.b16 %v753
        %v790 = vunpack.c.l.b16 %v754
        %v791 = vunpack.c.l.b16 %v755
        %v792 = vunpack.c.l.b16 %v756
        %v793 = vunpack.c.l.b16 %v757
        %v794 = vunpack.c.l.b16 %v758
        %v795 = vunpack.c.l.b16 %v759
        %v796 = vunpack.c.l.b16 %v760
        %v797 = vunpack.c.l.b16 %v761
        %v798 = vunpack.c.l.b16 %v762
        %v799 = vunpack.c.l.b16 %v763
        %v800 = vunpack.c.l.b16 %v764
        %v801 = vpack.c.b16 %v786, %v785
        %v802 = vpack.c.b16 %v788, %v787
        %v803 = vpack.c.b16 %v790, %v789
        %v804 = vpack.c.b16 %v792, %v791
        %v805 = vpack.c.b16 %v794, %v793
        %v806 = vpack.c.b16 %v796, %v795
        %v807 = vpack.c.b16 %v798, %v797
        %v808 = vpack.c.b16 %v800, %v799
        %817 = vmatpush.bf16.msra.mxu0 %v808
        %818 = vmatpush.bf16.msra.mxu0 %v807
        %819 = vmatpush.bf16.msra.mxu0 %v806
        %820 = vmatpush.bf16.msra.mxu0 %v805
        %821 = vmatpush.bf16.msra.mxu0 %v804
        %822 = vmatpush.bf16.msra.mxu0 %v803
        %823 = vmatpush.bf16.msra.mxu0 %v802
        %824 = vmatpush.bf16.msra.mxu0 %v801
        %825 = vmatmul.bf16.gmra.mxu0 %v667
        %v826 = vpop.f32.mrf.mxu0
        %v827 = vadd.f32 %v767, %v826
        %v828 = vpop.f32.mrf.mxu0
        %829 = vdwg.mxu0
        %v830 = vld [vmem:[#allocation9] sm:$0xf]
        %v831 = vld [vmem:[#allocation9 + $0x4] sm:$0xf]
        %v832 = vld [vmem:[#allocation9 + $0x8] sm:$0xf]
        %v833 = vld [vmem:[#allocation9 + $0xc] sm:$0xf]
        %v834 = vld [vmem:[#allocation9 + $0x10] sm:$0xf]
        %v835 = vld [vmem:[#allocation9 + $0x14] sm:$0xf]
        %v836 = vld [vmem:[#allocation9 + $0x18] sm:$0xf]
        %v837 = vld [vmem:[#allocation9 + $0x1c] sm:$0xf]
        %v838 = vld [vmem:[#allocation9 + $0x20] sm:$0xf]
        %v839 = vld [vmem:[#allocation9 + $0x24] sm:$0xf]
        %v840 = vld [vmem:[#allocation9 + $0x28] sm:$0xf]
        %v841 = vld [vmem:[#allocation9 + $0x2c] sm:$0xf]
        %v842 = vld [vmem:[#allocation9 + $0x30] sm:$0xf]
        %v843 = vld [vmem:[#allocation9 + $0x34] sm:$0xf]
        %v844 = vld [vmem:[#allocation9 + $0x38] sm:$0xf]
        %v845 = vld [vmem:[#allocation9 + $0x3c] sm:$0xf]
        %v846 = vld [vmem:[%s6] sm:$0x1]
        %v848 = vperm.slane %v846, 0
        %v866 = vunpack.c.l.b16 %v830
        %v867 = vunpack.c.l.b16 %v831
        %v868 = vunpack.c.l.b16 %v832
        %v869 = vunpack.c.l.b16 %v833
        %v870 = vunpack.c.l.b16 %v834
        %v871 = vunpack.c.l.b16 %v835
        %v872 = vunpack.c.l.b16 %v836
        %v873 = vunpack.c.l.b16 %v837
        %v874 = vunpack.c.l.b16 %v838
        %v875 = vunpack.c.l.b16 %v839
        %v876 = vunpack.c.l.b16 %v840
        %v877 = vunpack.c.l.b16 %v841
        %v878 = vunpack.c.l.b16 %v842
        %v879 = vunpack.c.l.b16 %v843
        %v880 = vunpack.c.l.b16 %v844
        %v881 = vunpack.c.l.b16 %v845
        %v882 = vpack.c.b16 %v867, %v866
        %v883 = vpack.c.b16 %v869, %v868
        %v884 = vpack.c.b16 %v871, %v870
        %v885 = vpack.c.b16 %v873, %v872
        %v886 = vpack.c.b16 %v875, %v874
        %v887 = vpack.c.b16 %v877, %v876
        %v888 = vpack.c.b16 %v879, %v878
        %v889 = vpack.c.b16 %v881, %v880
        %898 = vmatpush.bf16.msra.mxu0 %v889
        %899 = vmatpush.bf16.msra.mxu0 %v888
        %900 = vmatpush.bf16.msra.mxu0 %v887
        %901 = vmatpush.bf16.msra.mxu0 %v886
        %902 = vmatpush.bf16.msra.mxu0 %v885
        %903 = vmatpush.bf16.msra.mxu0 %v884
        %904 = vmatpush.bf16.msra.mxu0 %v883
        %905 = vmatpush.bf16.msra.mxu0 %v882
        %906 = vmatmul.bf16.gmra.mxu0 %v667
        %v907 = vpop.f32.mrf.mxu0
        %v908 = vadd.f32 %v848, %v907
        %v909 = vpop.f32.mrf.mxu0
        %910 = vdwg.mxu0
        %v911 = vpack.c.bf16 %v746, %v746
        %v912 = vpack.c.bf16 %v827, %v827
        %v913 = vpack.c.bf16 %v908, %v908
        %vm914 = vcmask 261120
        %v916 = vsel %vm914, %v911, 0
        %v919 = vsel %vm914, %v912, 0
        %921 = vmatpush.bf16.xpose.msra.mxu0 0
        %922 = vmatpush.bf16.xpose.msra.mxu0 0
        %923 = vmatpush.bf16.xpose.msra.mxu0 0
        %924 = vmatpush.bf16.xpose.msra.mxu0 0
        %925 = vmatpush.bf16.xpose.msra.mxu0 0
        %926 = vmatpush.bf16.xpose.msra.mxu0 0
        %927 = vmatpush.bf16.xpose.msra.mxu0 0
        %928 = vmatpush.bf16.xpose.msra.mxu0 %v919
        %929 = vmatmul.bf16.gmra.mxu0 %v916
        %v930 = vpop.f32.mrf.mxu0
        %v931 = vadd.f32 0.0, %v930
        %v932 = vpop.f32.mrf.mxu0
        %933 = vdwg.mxu0
        %vm934 = vcmask 64512
        %v935 = vsel %vm934, %v931, -inf
        %936 = vmax.xlane.f32.xlu0 %v935
        %v937 = vpop.xlane.xlu0 %936
        %v938 = vsub.f32 %v931, %v937
        %v939 = vpack.c.bf16 %v938, %v938
        %v940 = vunpack.c.l.bf16 %v939
        %v941 = vmul.f32 %v940, 1.442695
        %v942 = vpow.pop %v941
        %v943 = vpack.c.bf16 %v942, %v942
        %v944 = vunpack.c.l.bf16 %v943
        %v945 = vsel %vm934, %v944, 0.0
        %946 = vadd.xlane.f32.xlu0 %v945
        %v947 = vpop.xlane.xlu0 %946
        %v949 = vsel %vm934, %v943, 0
        %vm951 = vcmask 1043456
        %v953 = vsel %vm951, %v913, 0
        %955 = vmatpush.bf16.msra.mxu0 0
        %956 = vmatpush.bf16.msra.mxu0 0
        %957 = vmatpush.bf16.msra.mxu0 0
        %958 = vmatpush.bf16.msra.mxu0 0
        %959 = vmatpush.bf16.msra.mxu0 0
        %960 = vmatpush.bf16.msra.mxu0 0
        %961 = vmatpush.bf16.msra.mxu0 0
        %962 = vmatpush.bf16.msra.mxu0 %v953
        %963 = vmatmul.bf16.gmra.mxu0 %v949
        %v964 = vpop.f32.mrf.mxu0
        %v965 = vadd.f32 0.0, %v964
        %v966 = vpop.f32.mrf.mxu0
        %967 = vdwg.mxu0
        %v968 = vrcp.pop %v947
        %v969 = vmul.f32 %v965, %v968
        %970 = vst.msk [vmem:[#allocation2] sm:$0xff] %vm914, %v969
        %v972 = vunpack.c.l.b16 %v911
        %v973 = vpack.c.b16 %v972, %v972
        %974 = vrot.lane.b32.xlu0 %v973, 96
        %v975 = vpop.permute.xlu0 %974
        %v977 = vunpack.c.l.b16 %v912
        %v978 = vpack.c.b16 %v977, %v977
        %979 = vrot.lane.b32.xlu0 %v978, 96
        %v980 = vpop.permute.xlu0 %979
        %v982 = vsel %vm914, %v975, 0
        %v985 = vsel %vm914, %v980, 0
        %987 = vmatpush.bf16.xpose.msra.mxu0 0
        %988 = vmatpush.bf16.xpose.msra.mxu0 0
        %989 = vmatpush.bf16.xpose.msra.mxu0 0
        %990 = vmatpush.bf16.xpose.msra.mxu0 0
        %991 = vmatpush.bf16.xpose.msra.mxu0 0
        %992 = vmatpush.bf16.xpose.msra.mxu0 0
        %993 = vmatpush.bf16.xpose.msra.mxu0 0
        %994 = vmatpush.bf16.xpose.msra.mxu0 %v985
        %995 = vmatmul.bf16.gmra.mxu0 %v982
        %v996 = vpop.f32.mrf.mxu0
        %v997 = vadd.f32 0.0, %v996
        %v998 = vpop.f32.mrf.mxu0
        %999 = vdwg.mxu0
        %v1000 = vsel %vm934, %v997, -inf
        %1001 = vmax.xlane.f32.xlu0 %v1000
        %v1002 = vpop.xlane.xlu0 %1001
        %v1003 = vsub.f32 %v997, %v1002
        %v1004 = vpack.c.bf16 %v1003, %v1003
        %v1005 = vunpack.c.l.bf16 %v1004
        %v1006 = vmul.f32 %v1005, 1.442695
        %v1007 = vpow.pop %v1006
        %v1008 = vpack.c.bf16 %v1007, %v1007
        %v1009 = vunpack.c.l.bf16 %v1008
        %v1010 = vsel %vm934, %v1009, 0.0
        %1011 = vadd.xlane.f32.xlu0 %v1010
        %v1012 = vpop.xlane.xlu0 %1011
        %v1014 = vunpack.c.l.b16 %v913
        %v1015 = vpack.c.b16 %v1014, %v1014
        %1016 = vrot.lane.b32.xlu0 %v1015, 96
        %v1017 = vpop.permute.xlu0 %1016
        %v1019 = vsel %vm934, %v1008, 0
        %v1022 = vsel %vm951, %v1017, 0
        %1024 = vmatpush.bf16.msra.mxu0 0
        %1025 = vmatpush.bf16.msra.mxu0 0
        %1026 = vmatpush.bf16.msra.mxu0 0
        %1027 = vmatpush.bf16.msra.mxu0 0
        %1028 = vmatpush.bf16.msra.mxu0 0
        %1029 = vmatpush.bf16.msra.mxu0 0
        %1030 = vmatpush.bf16.msra.mxu0 0
        %1031 = vmatpush.bf16.msra.mxu0 %v1022
        %1032 = vmatmul.bf16.gmra.mxu0 %v1019
        %v1033 = vpop.f32.mrf.mxu0
        %v1034 = vadd.f32 0.0, %v1033
        %v1035 = vpop.f32.mrf.mxu0
        %1036 = vdwg.mxu0
        %v1037 = vrcp.pop %v1012
        %v1038 = vmul.f32 %v1034, %v1037
        %1040 = vrot.lane.b32.xlu0 %v1038, 32
        %v1041 = vpop.permute.xlu0 %1040
        %vm1043 = vcmask 523520
        %1044 = vst.msk [vmem:[#allocation2] sm:$0xff] %vm1043, %v1041
        %1045 = vrot.lane.b32.xlu0 %v973, 64
        %v1046 = vpop.permute.xlu0 %1045
        %1047 = vrot.lane.b32.xlu0 %v978, 64
        %v1048 = vpop.permute.xlu0 %1047
        %v1050 = vsel %vm914, %v1046, 0
        %v1053 = vsel %vm914, %v1048, 0
        %1055 = vmatpush.bf16.xpose.msra.mxu0 0
        %1056 = vmatpush.bf16.xpose.msra.mxu0 0
        %1057 = vmatpush.bf16.xpose.msra.mxu0 0
        %1058 = vmatpush.bf16.xpose.msra.mxu0 0
        %1059 = vmatpush.bf16.xpose.msra.mxu0 0
        %1060 = vmatpush.bf16.xpose.msra.mxu0 0
        %1061 = vmatpush.bf16.xpose.msra.mxu0 0
        %1062 = vmatpush.bf16.xpose.msra.mxu0 %v1053
        %1063 = vmatmul.bf16.gmra.mxu0 %v1050
        %v1064 = vpop.f32.mrf.mxu0
        %v1065 = vadd.f32 0.0, %v1064
        %v1066 = vpop.f32.mrf.mxu0
        %1067 = vdwg.mxu0
        %v1068 = vsel %vm934, %v1065, -inf
        %1069 = vmax.xlane.f32.xlu0 %v1068
        %v1070 = vpop.xlane.xlu0 %1069
        %v1071 = vsub.f32 %v1065, %v1070
        %v1072 = vpack.c.bf16 %v1071, %v1071
        %v1073 = vunpack.c.l.bf16 %v1072
        %v1074 = vmul.f32 %v1073, 1.442695
        %v1075 = vpow.pop %v1074
        %v1076 = vpack.c.bf16 %v1075, %v1075
        %v1077 = vunpack.c.l.bf16 %v1076
        %v1078 = vsel %vm934, %v1077, 0.0
        %1079 = vadd.xlane.f32.xlu0 %v1078
        %v1080 = vpop.xlane.xlu0 %1079
        %1081 = vrot.lane.b32.xlu0 %v1015, 64
        %v1082 = vpop.permute.xlu0 %1081
        %v1084 = vsel %vm934, %v1076, 0
        %v1087 = vsel %vm951, %v1082, 0
        %1089 = vmatpush.bf16.msra.mxu0 0
        %1090 = vmatpush.bf16.msra.mxu0 0
        %1091 = vmatpush.bf16.msra.mxu0 0
        %1092 = vmatpush.bf16.msra.mxu0 0
        %1093 = vmatpush.bf16.msra.mxu0 0
        %1094 = vmatpush.bf16.msra.mxu0 0
        %1095 = vmatpush.bf16.msra.mxu0 0
        %1096 = vmatpush.bf16.msra.mxu0 %v1087
        %1097 = vmatmul.bf16.gmra.mxu0 %v1084
        %v1098 = vpop.f32.mrf.mxu0
        %v1099 = vadd.f32 0.0, %v1098
        %v1100 = vpop.f32.mrf.mxu0
        %1101 = vdwg.mxu0
        %v1102 = vrcp.pop %v1080
        %v1103 = vmul.f32 %v1099, %v1102
        %1105 = vrot.lane.b32.xlu0 %v1103, 64
        %v1106 = vpop.permute.xlu0 %1105
        %vm1108 = vcmask 785920
        %1109 = vst.msk [vmem:[#allocation2] sm:$0xff] %vm1108, %v1106
        %1110 = vrot.lane.b32.xlu0 %v973, 32
        %v1111 = vpop.permute.xlu0 %1110
        %1112 = vrot.lane.b32.xlu0 %v978, 32
        %v1113 = vpop.permute.xlu0 %1112
        %v1115 = vsel %vm914, %v1111, 0
        %v1118 = vsel %vm914, %v1113, 0
        %1120 = vmatpush.bf16.xpose.msra.mxu0 0
        %1121 = vmatpush.bf16.xpose.msra.mxu0 0
        %1122 = vmatpush.bf16.xpose.msra.mxu0 0
        %1123 = vmatpush.bf16.xpose.msra.mxu0 0
        %1124 = vmatpush.bf16.xpose.msra.mxu0 0
        %1125 = vmatpush.bf16.xpose.msra.mxu0 0
        %1126 = vmatpush.bf16.xpose.msra.mxu0 0
        %1127 = vmatpush.bf16.xpose.msra.mxu0 %v1118
        %1128 = vmatmul.bf16.gmra.mxu0 %v1115
        %v1129 = vpop.f32.mrf.mxu0
        %v1130 = vadd.f32 0.0, %v1129
        %v1131 = vpop.f32.mrf.mxu0
        %1132 = vdwg.mxu0
        %v1133 = vsel %vm934, %v1130, -inf
        %1134 = vmax.xlane.f32.xlu0 %v1133
        %v1135 = vpop.xlane.xlu0 %1134
        %v1136 = vsub.f32 %v1130, %v1135
        %v1137 = vpack.c.bf16 %v1136, %v1136
        %v1138 = vunpack.c.l.bf16 %v1137
        %v1139 = vmul.f32 %v1138, 1.442695
        %v1140 = vpow.pop %v1139
        %v1141 = vpack.c.bf16 %v1140, %v1140
        %v1142 = vunpack.c.l.bf16 %v1141
        %v1143 = vsel %vm934, %v1142, 0.0
        %1144 = vadd.xlane.f32.xlu0 %v1143
        %v1145 = vpop.xlane.xlu0 %1144
        %1146 = vrot.lane.b32.xlu0 %v1015, 32
        %v1147 = vpop.permute.xlu0 %1146
        %v1149 = vsel %vm934, %v1141, 0
        %v1152 = vsel %vm951, %v1147, 0
        %1154 = vmatpush.bf16.msra.mxu0 0
        %1155 = vmatpush.bf16.msra.mxu0 0
        %1156 = vmatpush.bf16.msra.mxu0 0
        %1157 = vmatpush.bf16.msra.mxu0 0
        %1158 = vmatpush.bf16.msra.mxu0 0
        %1159 = vmatpush.bf16.msra.mxu0 0
        %1160 = vmatpush.bf16.msra.mxu0 0
        %1161 = vmatpush.bf16.msra.mxu0 %v1152
        %1162 = vmatmul.bf16.gmra.mxu0 %v1149
        %v1163 = vpop.f32.mrf.mxu0
        %v1164 = vadd.f32 0.0, %v1163
        %v1165 = vpop.f32.mrf.mxu0
        %1166 = vdwg.mxu0
        %v1167 = vrcp.pop %v1145
        %v1168 = vmul.f32 %v1164, %v1167
        %1170 = vrot.lane.b32.xlu0 %v1168, 96
        %v1171 = vpop.permute.xlu0 %1170
        %vm1173 = vcmask 1048320
        %1174 = vst.msk [vmem:[#allocation2] sm:$0xff] %vm1173, %v1171
        %v1175 = vld [vmem:[#allocation2] sm:$0xff]
        %v1176 = vpack.c.bf16 %v1175, %v1175
        %v1177 = vld [vmem:[#allocation11] sm:$0xf]
        %v1178 = vld [vmem:[#allocation11 + $0x4] sm:$0xf]
        %v1179 = vld [vmem:[#allocation11 + $0x8] sm:$0xf]
        %v1180 = vld [vmem:[#allocation11 + $0xc] sm:$0xf]
        %v1181 = vld [vmem:[#allocation11 + $0x10] sm:$0xf]
        %v1182 = vld [vmem:[#allocation11 + $0x14] sm:$0xf]
        %v1183 = vld [vmem:[#allocation11 + $0x18] sm:$0xf]
        %v1184 = vld [vmem:[#allocation11 + $0x1c] sm:$0xf]
        %v1185 = vld [vmem:[#allocation11 + $0x20] sm:$0xf]
        %v1186 = vld [vmem:[#allocation11 + $0x24] sm:$0xf]
        %v1187 = vld [vmem:[#allocation11 + $0x28] sm:$0xf]
        %v1188 = vld [vmem:[#allocation11 + $0x2c] sm:$0xf]
        %v1189 = vld [vmem:[#allocation11 + $0x30] sm:$0xf]
        %v1190 = vld [vmem:[#allocation11 + $0x34] sm:$0xf]
        %v1191 = vld [vmem:[#allocation11 + $0x38] sm:$0xf]
        %v1192 = vld [vmem:[#allocation11 + $0x3c] sm:$0xf]
        %v1193 = vld [vmem:[%s8] sm:$0x1]
        %v1195 = vperm.slane %v1193, 0
        %v1213 = vunpack.c.l.b16 %v1177
        %v1214 = vunpack.c.l.b16 %v1178
        %v1215 = vunpack.c.l.b16 %v1179
        %v1216 = vunpack.c.l.b16 %v1180
        %v1217 = vunpack.c.l.b16 %v1181
        %v1218 = vunpack.c.l.b16 %v1182
        %v1219 = vunpack.c.l.b16 %v1183
        %v1220 = vunpack.c.l.b16 %v1184
        %v1221 = vunpack.c.l.b16 %v1185
        %v1222 = vunpack.c.l.b16 %v1186
        %v1223 = vunpack.c.l.b16 %v1187
        %v1224 = vunpack.c.l.b16 %v1188
        %v1225 = vunpack.c.l.b16 %v1189
        %v1226 = vunpack.c.l.b16 %v1190
        %v1227 = vunpack.c.l.b16 %v1191
        %v1228 = vunpack.c.l.b16 %v1192
        %v1229 = vpack.c.b16 %v1214, %v1213
        %v1230 = vpack.c.b16 %v1216, %v1215
        %v1231 = vpack.c.b16 %v1218, %v1217
        %v1232 = vpack.c.b16 %v1220, %v1219
        %v1233 = vpack.c.b16 %v1222, %v1221
        %v1234 = vpack.c.b16 %v1224, %v1223
        %v1235 = vpack.c.b16 %v1226, %v1225
        %v1236 = vpack.c.b16 %v1228, %v1227
        %1245 = vmatpush.bf16.msra.mxu0 %v1236
        %1246 = vmatpush.bf16.msra.mxu0 %v1235
        %1247 = vmatpush.bf16.msra.mxu0 %v1234
        %1248 = vmatpush.bf16.msra.mxu0 %v1233
        %1249 = vmatpush.bf16.msra.mxu0 %v1232
        %1250 = vmatpush.bf16.msra.mxu0 %v1231
        %1251 = vmatpush.bf16.msra.mxu0 %v1230
        %1252 = vmatpush.bf16.msra.mxu0 %v1229
        %1253 = vmatmul.bf16.gmra.mxu0 %v1176
        %v1254 = vpop.f32.mrf.mxu0
        %v1255 = vadd.f32 %v1195, %v1254
        %v1256 = vpop.f32.mrf.mxu0
        %1257 = vdwg.mxu0
        %v1258 = vadd.f32 %v666, %v1255
        %v1259 = vld [vmem:[%s9] sm:$0x1]
        %v1260 = vld [vmem:[%s10] sm:$0x1]
        %1261 = vadd.xlane.f32.xlu0 %v1258
        %v1262 = vpop.xlane.xlu0 %1261
        %v1263 = vrcp.pop 128.0
        %v1264 = vmul.f32 128.0, %v1263
        %v1265 = vsub.f32 1.0, %v1264
        %v1266 = vmul.f32 %v1263, %v1265
        %v1267 = vadd.f32 %v1263, %v1266
        %vm1268 = vweird.f32 %v1263
        %v1269 = vsel %vm1268, %v1263, %v1267
        %v1270 = vmul.f32 %v1262, %v1269
        %v1271 = vsub.f32 %v1258, %v1270
        %v1272 = vmul.f32 %v1271, %v1271
        %1273 = vadd.xlane.f32.xlu0 %v1272
        %v1274 = vpop.xlane.xlu0 %1273
        %v1275 = vmul.f32 %v1274, %v1269
        %v1276 = vadd.f32 %v1275, 1e-05
        %v1277 = vrsqrt.pop %v1276
        %v1278 = vmul.f32 %v1277, %v1276
        %v1279 = vmul.f32 %v1278, %v1277
        %v1280 = vmul.f32 0.5, %v1279
        %v1281 = vsub.f32 1.5, %v1280
        %v1282 = vmul.f32 %v1277, %v1281
        %vm1283 = vweird.f32 %v1276
        %vm1284 = vweird.f32 %v1277
        %vm1285 = vmor %vm1283, %vm1284
        %v1286 = vsel %vm1285, %v1277, %v1282
        %v1287 = vmul.f32 %v1271, %v1286
        %v1289 = vperm.slane %v1259, 0
        %v1291 = vmul.f32 %v1287, %v1289
        %v1293 = vperm.slane %v1260, 0
        %v1295 = vadd.f32 %v1291, %v1293
        %v1296 = vpack.c.bf16 %v1295, %v1295
        %v1297 = vld [vmem:[#allocation12] sm:$0xff]
        %v1298 = vld [vmem:[#allocation12 + $0x8] sm:$0xff]
        %v1299 = vld [vmem:[#allocation12 + $0x10] sm:$0xff]
        %v1300 = vld [vmem:[#allocation12 + $0x18] sm:$0xff]
        %v1301 = vld [vmem:[#allocation12 + $0x20] sm:$0xff]
        %v1302 = vld [vmem:[#allocation12 + $0x28] sm:$0xff]
        %v1303 = vld [vmem:[#allocation12 + $0x30] sm:$0xff]
        %v1304 = vld [vmem:[#allocation12 + $0x38] sm:$0xff]
        %v1305 = vld [vmem:[#allocation12 + $0x40] sm:$0xff]
        %v1306 = vld [vmem:[#allocation12 + $0x48] sm:$0xff]
        %v1307 = vld [vmem:[#allocation12 + $0x50] sm:$0xff]
        %v1308 = vld [vmem:[#allocation12 + $0x58] sm:$0xff]
        %v1309 = vld [vmem:[#allocation12 + $0x60] sm:$0xff]
        %v1310 = vld [vmem:[#allocation12 + $0x68] sm:$0xff]
        %v1311 = vld [vmem:[#allocation12 + $0x70] sm:$0xff]
        %v1312 = vld [vmem:[#allocation12 + $0x78] sm:$0xff]
        %v1313 = vld [vmem:[%s12] sm:$0x3]
        %v1315 = vperm.slane %v1313, 0
        %v1316 = vperm.slane %v1313, 1
        %v1335 = vunpack.c.l.b16 %v1297
        %v1336 = vunpack.c.h.b16 %v1297
        %v1337 = vunpack.c.l.b16 %v1298
        %v1338 = vunpack.c.h.b16 %v1298
        %v1339 = vunpack.c.l.b16 %v1299
        %v1340 = vunpack.c.h.b16 %v1299
        %v1341 = vunpack.c.l.b16 %v1300
        %v1342 = vunpack.c.h.b16 %v1300
        %v1343 = vunpack.c.l.b16 %v1301
        %v1344 = vunpack.c.h.b16 %v1301
        %v1345 = vunpack.c.l.b16 %v1302
        %v1346 = vunpack.c.h.b16 %v1302
        %v1347 = vunpack.c.l.b16 %v1303
        %v1348 = vunpack.c.h.b16 %v1303
        %v1349 = vunpack.c.l.b16 %v1304
        %v1350 = vunpack.c.h.b16 %v1304
        %v1351 = vunpack.c.l.b16 %v1305
        %v1352 = vunpack.c.h.b16 %v1305
        %v1353 = vunpack.c.l.b16 %v1306
        %v1354 = vunpack.c.h.b16 %v1306
        %v1355 = vunpack.c.l.b16 %v1307
        %v1356 = vunpack.c.h.b16 %v1307
        %v1357 = vunpack.c.l.b16 %v1308
        %v1358 = vunpack.c.h.b16 %v1308
        %v1359 = vunpack.c.l.b16 %v1309
        %v1360 = vunpack.c.h.b16 %v1309
        %v1361 = vunpack.c.l.b16 %v1310
        %v1362 = vunpack.c.h.b16 %v1310
        %v1363 = vunpack.c.l.b16 %v1311
        %v1364 = vunpack.c.h.b16 %v1311
        %v1365 = vunpack.c.l.b16 %v1312
        %v1366 = vunpack.c.h.b16 %v1312
        %v1367 = vpack.c.b16 %v1337, %v1335
        %v1368 = vpack.c.b16 %v1338, %v1336
        %v1369 = vpack.c.b16 %v1341, %v1339
        %v1370 = vpack.c.b16 %v1342, %v1340
        %v1371 = vpack.c.b16 %v1345, %v1343
        %v1372 = vpack.c.b16 %v1346, %v1344
        %v1373 = vpack.c.b16 %v1349, %v1347
        %v1374 = vpack.c.b16 %v1350, %v1348
        %v1375 = vpack.c.b16 %v1353, %v1351
        %v1376 = vpack.c.b16 %v1354, %v1352
        %v1377 = vpack.c.b16 %v1357, %v1355
        %v1378 = vpack.c.b16 %v1358, %v1356
        %v1379 = vpack.c.b16 %v1361, %v1359
        %v1380 = vpack.c.b16 %v1362, %v1360
        %v1381 = vpack.c.b16 %v1365, %v1363
        %v1382 = vpack.c.b16 %v1366, %v1364
        %1399 = vmatpush.bf16.msra.mxu0 %v1381
        %1400 = vmatpush.bf16.msra.mxu0 %v1379
        %1401 = vmatpush.bf16.msra.mxu0 %v1377
        %1402 = vmatpush.bf16.msra.mxu0 %v1375
        %1403 = vmatpush.bf16.msra.mxu0 %v1373
        %1404 = vmatpush.bf16.msra.mxu0 %v1371
        %1405 = vmatpush.bf16.msra.mxu0 %v1369
        %1406 = vmatpush.bf16.msra.mxu0 %v1367
        %1407 = vmatmul.bf16.gmra.mxu0 %v1296
        %v1408 = vpop.f32.mrf.mxu0
        %v1409 = vadd.f32 %v1315, %v1408
        %v1410 = vpop.f32.mrf.mxu0
        %1411 = vdwg.mxu0
        %1412 = vmatpush.bf16.msra.mxu0 %v1382
        %1413 = vmatpush.bf16.msra.mxu0 %v1380
        %1414 = vmatpush.bf16.msra.mxu0 %v1378
        %1415 = vmatpush.bf16.msra.mxu0 %v1376
        %1416 = vmatpush.bf16.msra.mxu0 %v1374
        %1417 = vmatpush.bf16.msra.mxu0 %v1372
        %1418 = vmatpush.bf16.msra.mxu0 %v1370
        %1419 = vmatpush.bf16.msra.mxu0 %v1368
        %1420 = vmatmul.bf16.gmra.mxu0 %v1296
        %v1421 = vpop.f32.mrf.mxu0
        %v1422 = vadd.f32 %v1316, %v1421
        %v1423 = vpop.f32.mrf.mxu0
        %1424 = vdwg.mxu0
        %v1425 = vmax.f32 %v1409, 0.0
        %v1426 = vmax.f32 %v1422, 0.0
        %v1427 = vpack.c.bf16 %v1425, %v1425
        %v1428 = vpack.c.bf16 %v1426, %v1426
        %v1429 = vld [vmem:[#allocation14] sm:$0xf]
        %v1430 = vld [vmem:[#allocation14 + $0x4] sm:$0xf]
        %v1431 = vld [vmem:[#allocation14 + $0x8] sm:$0xf]
        %v1432 = vld [vmem:[#allocation14 + $0xc] sm:$0xf]
        %v1433 = vld [vmem:[#allocation14 + $0x10] sm:$0xf]
        %v1434 = vld [vmem:[#allocation14 + $0x14] sm:$0xf]
        %v1435 = vld [vmem:[#allocation14 + $0x18] sm:$0xf]
        %v1436 = vld [vmem:[#allocation14 + $0x1c] sm:$0xf]
        %v1437 = vld [vmem:[#allocation14 + $0x20] sm:$0xf]
        %v1438 = vld [vmem:[#allocation14 + $0x24] sm:$0xf]
        %v1439 = vld [vmem:[#allocation14 + $0x28] sm:$0xf]
        %v1440 = vld [vmem:[#allocation14 + $0x2c] sm:$0xf]
        %v1441 = vld [vmem:[#allocation14 + $0x30] sm:$0xf]
        %v1442 = vld [vmem:[#allocation14 + $0x34] sm:$0xf]
        %v1443 = vld [vmem:[#allocation14 + $0x38] sm:$0xf]
        %v1444 = vld [vmem:[#allocation14 + $0x3c] sm:$0xf]
        %v1445 = vld [vmem:[#allocation14 + $0x40] sm:$0xf]
        %v1446 = vld [vmem:[#allocation14 + $0x44] sm:$0xf]
        %v1447 = vld [vmem:[#allocation14 + $0x48] sm:$0xf]
        %v1448 = vld [vmem:[#allocation14 + $0x4c] sm:$0xf]
        %v1449 = vld [vmem:[#allocation14 + $0x50] sm:$0xf]
        %v1450 = vld [vmem:[#allocation14 + $0x54] sm:$0xf]
        %v1451 = vld [vmem:[#allocation14 + $0x58] sm:$0xf]
        %v1452 = vld [vmem:[#allocation14 + $0x5c] sm:$0xf]
        %v1453 = vld [vmem:[#allocation14 + $0x60] sm:$0xf]
        %v1454 = vld [vmem:[#allocation14 + $0x64] sm:$0xf]
        %v1455 = vld [vmem:[#allocation14 + $0x68] sm:$0xf]
        %v1456 = vld [vmem:[#allocation14 + $0x6c] sm:$0xf]
        %v1457 = vld [vmem:[#allocation14 + $0x70] sm:$0xf]
        %v1458 = vld [vmem:[#allocation14 + $0x74] sm:$0xf]
        %v1459 = vld [vmem:[#allocation14 + $0x78] sm:$0xf]
        %v1460 = vld [vmem:[#allocation14 + $0x7c] sm:$0xf]
        %v1461 = vld [vmem:[%s14] sm:$0x1]
        %v1463 = vperm.slane %v1461, 0
        %v1497 = vunpack.c.l.b16 %v1429
        %v1498 = vunpack.c.l.b16 %v1430
        %v1499 = vunpack.c.l.b16 %v1431
        %v1500 = vunpack.c.l.b16 %v1432
        %v1501 = vunpack.c.l.b16 %v1433
        %v1502 = vunpack.c.l.b16 %v1434
        %v1503 = vunpack.c.l.b16 %v1435
        %v1504 = vunpack.c.l.b16 %v1436
        %v1505 = vunpack.c.l.b16 %v1437
        %v1506 = vunpack.c.l.b16 %v1438
        %v1507 = vunpack.c.l.b16 %v1439
        %v1508 = vunpack.c.l.b16 %v1440
        %v1509 = vunpack.c.l.b16 %v1441
        %v1510 = vunpack.c.l.b16 %v1442
        %v1511 = vunpack.c.l.b16 %v1443
        %v1512 = vunpack.c.l.b16 %v1444
        %v1513 = vunpack.c.l.b16 %v1445
        %v1514 = vunpack.c.l.b16 %v1446
        %v1515 = vunpack.c.l.b16 %v1447
        %v1516 = vunpack.c.l.b16 %v1448
        %v1517 = vunpack.c.l.b16 %v1449
        %v1518 = vunpack.c.l.b16 %v1450
        %v1519 = vunpack.c.l.b16 %v1451
        %v1520 = vunpack.c.l.b16 %v1452
        %v1521 = vunpack.c.l.b16 %v1453
        %v1522 = vunpack.c.l.b16 %v1454
        %v1523 = vunpack.c.l.b16 %v1455
        %v1524 = vunpack.c.l.b16 %v1456
        %v1525 = vunpack.c.l.b16 %v1457
        %v1526 = vunpack.c.l.b16 %v1458
        %v1527 = vunpack.c.l.b16 %v1459
        %v1528 = vunpack.c.l.b16 %v1460
        %v1529 = vpack.c.b16 %v1498, %v1497
        %v1530 = vpack.c.b16 %v1500, %v1499
        %v1531 = vpack.c.b16 %v1502, %v1501
        %v1532 = vpack.c.b16 %v1504, %v1503
        %v1533 = vpack.c.b16 %v1506, %v1505
        %v1534 = vpack.c.b16 %v1508, %v1507
        %v1535 = vpack.c.b16 %v1510, %v1509
        %v1536 = vpack.c.b16 %v1512, %v1511
        %v1537 = vpack.c.b16 %v1514, %v1513
        %v1538 = vpack.c.b16 %v1516, %v1515
        %v1539 = vpack.c.b16 %v1518, %v1517
        %v1540 = vpack.c.b16 %v1520, %v1519
        %v1541 = vpack.c.b16 %v1522, %v1521
        %v1542 = vpack.c.b16 %v1524, %v1523
        %v1543 = vpack.c.b16 %v1526, %v1525
        %v1544 = vpack.c.b16 %v1528, %v1527
        %1561 = vmatpush.bf16.msra.mxu0 %v1536
        %1562 = vmatpush.bf16.msra.mxu0 %v1535
        %1563 = vmatpush.bf16.msra.mxu0 %v1534
        %1564 = vmatpush.bf16.msra.mxu0 %v1533
        %1565 = vmatpush.bf16.msra.mxu0 %v1532
        %1566 = vmatpush.bf16.msra.mxu0 %v1531
        %1567 = vmatpush.bf16.msra.mxu0 %v1530
        %1568 = vmatpush.bf16.msra.mxu0 %v1529
        %1569 = vmatmul.bf16.gmra.mxu0 %v1427
        %v1570 = vpop.f32.mrf.mxu0
        %v1571 = vadd.f32 %v1463, %v1570
        %v1572 = vpop.f32.mrf.mxu0
        %1573 = vdwg.mxu0
        %1574 = vmatpush.bf16.msra.mxu0 %v1544
        %1575 = vmatpush.bf16.msra.mxu0 %v1543
        %1576 = vmatpush.bf16.msra.mxu0 %v1542
        %1577 = vmatpush.bf16.msra.mxu0 %v1541
        %1578 = vmatpush.bf16.msra.mxu0 %v1540
        %1579 = vmatpush.bf16.msra.mxu0 %v1539
        %1580 = vmatpush.bf16.msra.mxu0 %v1538
        %1581 = vmatpush.bf16.msra.mxu0 %v1537
        %1582 = vmatmul.bf16.gmra.mxu0 %v1428
        %v1583 = vpop.f32.mrf.mxu0
        %v1584 = vadd.f32 %v1571, %v1583
        %v1585 = vpop.f32.mrf.mxu0
        %1586 = vdwg.mxu0
        %v1587 = vadd.f32 %v1295, %v1584
        %v1588 = vld [vmem:[%s15] sm:$0x1]
        %v1589 = vld [vmem:[%s16] sm:$0x1]
        %1590 = vadd.xlane.f32.xlu0 %v1587
        %v1591 = vpop.xlane.xlu0 %1590
        %v1592 = vmul.f32 %v1591, %v1269
        %v1593 = vsub.f32 %v1587, %v1592
        %v1594 = vmul.f32 %v1593, %v1593
        %1595 = vadd.xlane.f32.xlu0 %v1594
        %v1596 = vpop.xlane.xlu0 %1595
        %v1597 = vmul.f32 %v1596, %v1269
        %v1598 = vadd.f32 %v1597, 1e-05
        %v1599 = vrsqrt.pop %v1598
        %v1600 = vmul.f32 %v1599, %v1598
        %v1601 = vmul.f32 %v1600, %v1599
        %v1602 = vmul.f32 0.5, %v1601
        %v1603 = vsub.f32 1.5, %v1602
        %v1604 = vmul.f32 %v1599, %v1603
        %vm1605 = vweird.f32 %v1598
        %vm1606 = vweird.f32 %v1599
        %vm1607 = vmor %vm1605, %vm1606
        %v1608 = vsel %vm1607, %v1599, %v1604
        %v1609 = vmul.f32 %v1593, %v1608
        %v1611 = vperm.slane %v1588, 0
        %v1613 = vmul.f32 %v1609, %v1611
        %v1615 = vperm.slane %v1589, 0
        %v1617 = vadd.f32 %v1613, %v1615
        %1618 = vst [vmem:[%s664] sm:$0xff] %v1617
        %s1619 = sand.u32 %s407, 1
        %s1620 = scalar_lea.sflag [#allocation5], %s1619
        %s1621 = sand.u32 %s407, 1
        %s1622 = smul.addr %s1621, 8
        %s1623 = scalar_lea.vmem [#allocation15], %s1622
        // Predicated region
        $region117: #{tpu_custom_call.1} parent=87 // pred_check
          %p1624 = pneg %p417
        $region118: #{tpu_custom_call.1} parent=87 // pred_check_branch
          %1626 = sbr.rel (%p1624) target = $region120
        $region119: #{tpu_custom_call.1} parent=87 // pred_region
          %1628 = vsyncadd %s1620, 0
          %s1629 = smul.addr %s37, 8
          %s1630 = scalar_lea.hbm %s17, %s1629
          %s1632 = sshll.u32 %s1623, 4
          %s1633 = int_to_ptr.vmem [resolvable:$true] %s1632
          %s1634 = sshll.u32 %s1630, 4
          %s1635 = int_to_ptr.hbm [resolvable:$true] %s1634
          %1637 = dma.vmem_to_hbm [thread:$0]  %s1633, 128, %s1635, %s1620
        $region120: #{tpu_custom_call.1} parent=87 // pred_fallthru
          _
      $region88: #{tpu_custom_call.1} parent=5 // pred_fallthru
        _
      %p1638 = scmp.le.s32.totalorder 2, %s32
      // Predicated region
      $region121: #{tpu_custom_call.1} parent=5 // pred_check
        %p1639 = pneg %p1638
      $region122: #{tpu_custom_call.1} parent=5 // pred_check_branch
        %1641 = sbr.rel (%p1639) target = $region124
      $region123: #{tpu_custom_call.1} parent=5 // pred_region
        %s1642 = ssub.s32 %s32, 2
        // Predicated region
        $region125: #{tpu_custom_call.1} parent=123 // pred_check
          %p1643 = pneg %p423
        $region126: #{tpu_custom_call.1} parent=123 // pred_check_branch
          %1645 = sbr.rel (%p1643) target = $region128
        $region127: #{tpu_custom_call.1} parent=123 // pred_region
          %s1646 = sand.u32 %s408, 1
          %s1647 = scalar_lea.sflag [#allocation5], %s1646
          %s1648 = sand.u32 %s408, 1
          %s1649 = smul.addr %s1648, 8
          %s1650 = scalar_lea.vmem [#allocation15], %s1649
          %1652 = dma.done %s1647, 128
        $region128: #{tpu_custom_call.1} parent=123 // pred_fallthru
          _
      $region124: #{tpu_custom_call.1} parent=5 // pred_fallthru
        _
    $region6: #{tpu_custom_call.1} parent=1 // loop_footer
      %s36 = sadd.s32 1, %s32
    $region7: #{tpu_custom_call.1} parent=1 // loop_footer_branch
      %31 = sbr.rel target = $region3
    $region8: #{tpu_custom_call.1} parent=1 // loop_exit
      _
    %1653 = vsyncpa [#allocation4], 1
    %s1654 = scalar_lea.sflag [#allocation4], 1
    %1655 = vsyncpa %s1654, 1
    %1656 = vsyncpa [#allocation7], 1
    %1657 = vsyncpa [#allocation10], 1
    %1658 = vsyncpa [#allocation13], 1
    %1659 = vsyncpa [#allocation5], 1
    %s1660 = scalar_lea.sflag [#allocation5], 1
    %1661 = vsyncpa %s1660, 1

</llo_original>
